<compile_context>
chip_gen: v6e
topology: v6e:2x2x1
jax: 0.10.0
libtpu: 0.0.40
codegen_flags: <defaults>
</compile_context>

<pallas_src>
import jax
import jax.numpy as jnp
from jax import lax
from jax.experimental import pallas as pl
from jax.experimental.pallas import tpu as pltpu

_EPS = 1e-12      # matches AttentiveStatisticsPooling.eps
_NEG = -1.0e30    # finite "-inf" for masked logits (avoids inf-inf NaNs)


# ----------------------------------------------------------------------------
# Fused kernel: global stats -> context bias -> logits -> masked softmax ->
# weighted stats.  One batch element per grid step, full (C, T) slab in VMEM.
# ----------------------------------------------------------------------------
def _asp_fused_kernel(valid_ref, x_ref, w1x_ref, w1m_ref, w1s_ref, b1_ref,
                      bnsc_ref, bnsh_ref, w2_ref, mean_ref, std_ref):
    b = pl.program_id(0)

    x = x_ref[0]                                    # (C, T), input/compute dtype
    xf = x.astype(jnp.float32)                      # f32 copy for the statistics
    T = x.shape[1]

    valid = valid_ref[b]
    inv_n = 1.0 / valid.astype(jnp.float32)
    ok = lax.broadcasted_iota(jnp.int32, (1, T), 1) < valid        # (1, T)

    # ---- masked-uniform global stats (two-pass variance, matches reference) --
    xm = jnp.where(ok, xf, 0.0)
    mean_g = jnp.sum(xm, axis=-1, keepdims=True) * inv_n           # (C, 1)
    dg = xf - mean_g
    var_g = jnp.sum(jnp.where(ok, dg * dg, 0.0), axis=-1, keepdims=True) * inv_n
    std_g = jnp.sqrt(jnp.maximum(var_g, _EPS))                     # (C, 1)

    # Per-batch constant part of the first 1x1 conv:
    #   W1 @ [x; mean; std] + b1 = W1x @ x + (W1m @ mean + W1s @ std + b1)
    hbias = (jnp.dot(w1m_ref[...], mean_g, preferred_element_type=jnp.float32)
             + jnp.dot(w1s_ref[...], std_g, preferred_element_type=jnp.float32)
             + b1_ref[...])                                        # (A, 1) f32

    # ---- attention logits: 1x1 convs == MXU matmuls (input dtype, f32 acc) ---
    h = jnp.dot(w1x_ref[...], x, preferred_element_type=jnp.float32)   # (A, T)
    h = jnp.maximum(h + hbias, 0.0)                                     # +ctx, ReLU
    h = jnp.tanh(h * bnsc_ref[...] + bnsh_ref[...])                     # eval BN, tanh
    logit = jnp.dot(w2_ref[...], h.astype(w2_ref.dtype),
                    preferred_element_type=jnp.float32)                 # (C, T)
    # Conv1d bias b2 is dropped: a per-channel constant over T is a softmax no-op.

    # ---- masked softmax over T (lanes) + weighted mean/std -------------------
    logit = jnp.where(ok, logit, _NEG)
    m = jnp.max(logit, axis=-1, keepdims=True)                          # (C, 1)
    p = jnp.exp(logit - m)                 # masked frames underflow to exactly 0
    inv_d = 1.0 / jnp.sum(p, axis=-1, keepdims=True)
    mean_w = jnp.sum(p * xf, axis=-1, keepdims=True) * inv_d            # (C, 1)
    dw = xf - mean_w
    var_w = jnp.sum(p * (dw * dw), axis=-1, keepdims=True) * inv_d
    std_w = jnp.sqrt(jnp.maximum(var_w, _EPS))

    mean_ref[0] = mean_w.astype(mean_ref.dtype)
    std_ref[0] = std_w.astype(std_ref.dtype)


# ----------------------------------------------------------------------------
# Wrapper
# ----------------------------------------------------------------------------
def attentive_statistics_pooling(x, params, lengths=None):
    """x: (B, C, T) -> (B, 2C, 1). params holds tdnn/conv/batchnorm weights."""
    B, C, T = x.shape
    A = params['w1'].shape[0]
    out_dtype = x.dtype
    cdt = x.dtype                  # MXU compute dtype (bf16 in production)
    itemsize = jnp.dtype(x.dtype).itemsize

    if lengths is None:
        lengths = jnp.ones((B,), jnp.float32)
    valid = jnp.clip(jnp.ceil(lengths.astype(jnp.float32) * T), 1, T)
    valid = valid.astype(jnp.int32)                                   # (B,)

    # Pad attention channels to a sublane multiple (A sits on sublanes of the
    # (A, T) intermediate).  Zero-padded rows/cols are exact no-ops.
    A_pad = max(8, -(-A // 8) * 8)

    def pad_a(v, axis, value=0.0):
        if v.shape[axis] == A_pad:
            return v
        widths = [(0, 0)] * v.ndim
        widths[axis] = (0, A_pad - v.shape[axis])
        return jnp.pad(v, widths, constant_values=value)

    w1 = params['w1'].astype(jnp.float32)                             # (A, 3C)
    w1x = pad_a(w1[:, :C], 0)
    w1m = pad_a(w1[:, C:2 * C], 0)
    w1s = pad_a(w1[:, 2 * C:], 0)
    b1 = pad_a(params['b1'].astype(jnp.float32), 0)[:, None]          # (A_pad, 1)

    # Fold eval-mode BatchNorm1d into a per-channel affine.
    gamma = pad_a(params['bn_gamma'].astype(jnp.float32), 0)
    var = pad_a(params['bn_var'].astype(jnp.float32), 0, 1.0)
    mu = pad_a(params['bn_mean'].astype(jnp.float32), 0)
    beta = pad_a(params['bn_beta'].astype(jnp.float32), 0)
    bn_scale = gamma / jnp.sqrt(var + params['bn_eps'])
    bn_shift = beta - mu * bn_scale

    w1x_c = w1x.astype(cdt)                                           # (A_pad, C)
    w2_c = pad_a(params['w2'], 1).astype(cdt)                         # (C, A_pad)
    # params['b2'] intentionally unused: softmax over time is shift-invariant.

    # VMEM budget: x double-buffer + f32 intermediates + weights.
    x_block = C * T * itemsize
    f32_slab = C * T * 4
    w_bytes = A_pad * C * (2 * itemsize + 3 * 4)
    est = 2 * x_block + 10 * f32_slab + 2 * w_bytes + (2 << 20)
    if est > (112 << 20):
        # TODO(synk): streaming two-sweep fallback (online softmax over T tiles)
        # for sequences whose (C, T) slab does not fit in VMEM (cap ~64 MiB on v7x).
        raise NotImplementedError(
            "sequence too long for the fused VMEM-resident kernel")
    vmem_limit = int(min(max(est, 32 << 20), 128 << 20))

    # TODO(synk): when B < #TensorCores (v7x megacore), add a second parallel
    # split (over C, or over T with a 2-way softmax combine) to avoid idling a core.
    mean_w, std_w = pl.pallas_call(
        _asp_fused_kernel,
        out_shape=(jax.ShapeDtypeStruct((B, C, 1), jnp.float32),
                   jax.ShapeDtypeStruct((B, C, 1), jnp.float32)),
        grid_spec=pltpu.PrefetchScalarGridSpec(
            num_scalar_prefetch=1,
            grid=(B,),
            in_specs=[
                pl.BlockSpec((1, C, T), lambda b, v: (b, 0, 0)),   # x (native layout)
                pl.BlockSpec((A_pad, C), lambda b, v: (0, 0)),     # W1x (compute dtype)
                pl.BlockSpec((A_pad, C), lambda b, v: (0, 0)),     # W1m (f32)
                pl.BlockSpec((A_pad, C), lambda b, v: (0, 0)),     # W1s (f32)
                pl.BlockSpec((A_pad, 1), lambda b, v: (0, 0)),     # b1
                pl.BlockSpec((A_pad, 1), lambda b, v: (0, 0)),     # BN scale
                pl.BlockSpec((A_pad, 1), lambda b, v: (0, 0)),     # BN shift
                pl.BlockSpec((C, A_pad), lambda b, v: (0, 0)),     # W2 (compute dtype)
            ],
            out_specs=[pl.BlockSpec((1, C, 1), lambda b, v: (b, 0, 0)),
                       pl.BlockSpec((1, C, 1), lambda b, v: (b, 0, 0))]),
        compiler_params=pltpu.CompilerParams(
            dimension_semantics=("parallel",),
            vmem_limit_bytes=vmem_limit),
    )(valid, x, w1x_c, w1m, w1s, b1,
      bn_scale[:, None], bn_shift[:, None], w2_c)

    pooled = jnp.concatenate([mean_w, std_w], axis=1)                 # (B, 2C, 1)
    return pooled.astype(out_dtype)


# ----------------------------------------------------------------------------
# Pure-JAX reference mirroring the PyTorch forward.
# ----------------------------------------------------------------------------
def _reference(x, params, lengths=None):
    B, C, T = x.shape
    if lengths is None:
        lengths = jnp.ones((B,), jnp.float32)
    valid = jnp.clip(jnp.ceil(lengths * T), 1, T).astype(jnp.int32)
    mask = (jnp.arange(T)[None, :] < valid[:, None]).astype(jnp.float32)
    mask3 = mask[:, None, :]                                          # (B, 1, T)
    total = jnp.sum(mask3, axis=2, keepdims=True)

    def stats(x, m):
        mean = jnp.sum(m * x, axis=2)
        std = jnp.sqrt(jnp.clip(
            jnp.sum(m * (x - mean[:, :, None]) ** 2, axis=2), _EPS, None))
        return mean, std

    mean_g, std_g = stats(x, mask3 / total)
    attn_in = jnp.concatenate(
        [x, jnp.repeat(mean_g[:, :, None], T, axis=2),
         jnp.repeat(std_g[:, :, None], T, axis=2)], axis=1)           # (B, 3C, T)

    h = jnp.einsum('ac,bct->bat', params['w1'], attn_in) + params['b1'][None, :, None]
    h = jnp.maximum(h, 0.0)
    bn_scale = params['bn_gamma'] / jnp.sqrt(params['bn_var'] + params['bn_eps'])
    bn_shift = params['bn_beta'] - params['bn_mean'] * bn_scale
    h = jnp.tanh(h * bn_scale[None, :, None] + bn_shift[None, :, None])
    logit = jnp.einsum('ca,bat->bct', params['w2'], h) + params['b2'][None, :, None]
    logit = jnp.where(mask3 == 0, -jnp.inf, logit)
    attn = jax.nn.softmax(logit, axis=2)
    mean_w, std_w = stats(x, attn)
    return jnp.concatenate([mean_w, std_w], axis=1)[:, :, None]


if __name__ == "__main__":
    key = jax.random.PRNGKey(0)
    B, C, T = 2, 64, 16        # small demo shapes: batch=2, channels=64, time=16
    A = 16                     # attention_channels (kept small for the demo)

    ks = jax.random.split(key, 9)
    x = jax.random.normal(ks[0], (B, C, T), jnp.float32)
    lengths = jnp.array([1.0, 0.625], jnp.float32)   # second sequence: 10/16 frames

    params = dict(
        w1=0.3 * jax.random.normal(ks[1], (A, 3 * C), jnp.float32),
        b1=0.1 * jax.random.normal(ks[2], (A,), jnp.float32),
        bn_gamma=1.0 + 0.1 * jax.random.normal(ks[3], (A,), jnp.float32),
        bn_beta=0.1 * jax.random.normal(ks[4], (A,), jnp.float32),
        bn_mean=0.1 * jax.random.normal(ks[5], (A,), jnp.float32),
        bn_var=jnp.abs(1.0 + 0.1 * jax.random.normal(ks[6], (A,), jnp.float32)),
        bn_eps=1e-5,
        w2=0.3 * jax.random.normal(ks[7], (C, A), jnp.float32),
        b2=0.1 * jax.random.normal(ks[8], (C,), jnp.float32),
    )

    # f32 path: exact comparison against the reference.
    out = attentive_statistics_pooling(x, params, lengths)
    out = jax.block_until_ready(out)
    ref = _reference(x, params, lengths)
    assert out.shape == (B, 2 * C, 1), out.shape
    err = jnp.max(jnp.abs(out - ref))
    assert jnp.allclose(out, ref, atol=1e-4, rtol=1e-4), err

    # bf16 path: MXU matmuls run natively in bf16 (f32 accumulation).
    out_bf = attentive_statistics_pooling(x.astype(jnp.bfloat16), params, lengths)
    out_bf = jax.block_until_ready(out_bf)
    assert out_bf.dtype == jnp.bfloat16
    assert jnp.all(jnp.isfinite(out_bf.astype(jnp.float32)))
    assert jnp.allclose(out_bf.astype(jnp.float32), ref, atol=1e-1, rtol=1e-1)

    print("KERNEL_OK")
</pallas_src>

<mosaic_0001>
module attributes {stable_mosaic.version = 11 : i64} {
  func.func @_asp_fused_kernel(%arg0: i32, %arg1: memref<2xi32, #tpu.memory_space<smem>>, %arg2: memref<1x64x16xf32, #tpu.memory_space<vmem>>, %arg3: memref<16x64xf32, #tpu.memory_space<vmem>>, %arg4: memref<16x64xf32, #tpu.memory_space<vmem>>, %arg5: memref<16x64xf32, #tpu.memory_space<vmem>>, %arg6: memref<16x1xf32, #tpu.memory_space<vmem>>, %arg7: memref<16x1xf32, #tpu.memory_space<vmem>>, %arg8: memref<16x1xf32, #tpu.memory_space<vmem>>, %arg9: memref<64x16xf32, #tpu.memory_space<vmem>>, %arg10: memref<1x64x1xf32, #tpu.memory_space<vmem>>, %arg11: memref<1x64x1xf32, #tpu.memory_space<vmem>>) attributes {dimension_semantics = [#tpu.dimension_semantics<parallel>], iteration_bounds = array<i64: 2>, scalar_prefetch = 1 : i64, scratch_operands = 0 : i64, tpu.core_type = #tpu.core_type<tc>, window_params = [{transform_indices = @transform_0, window_bounds = array<i64: 1, 64, 16>}, {pipeline_mode = #tpu.pipeline_mode<synchronous>, transform_indices = @transform_1, window_bounds = array<i64: 16, 64>}, {pipeline_mode = #tpu.pipeline_mode<synchronous>, transform_indices = @transform_2, window_bounds = array<i64: 16, 64>}, {pipeline_mode = #tpu.pipeline_mode<synchronous>, transform_indices = @transform_3, window_bounds = array<i64: 16, 64>}, {pipeline_mode = #tpu.pipeline_mode<synchronous>, transform_indices = @transform_4, window_bounds = array<i64: 16, 1>}, {pipeline_mode = #tpu.pipeline_mode<synchronous>, transform_indices = @transform_5, window_bounds = array<i64: 16, 1>}, {pipeline_mode = #tpu.pipeline_mode<synchronous>, transform_indices = @transform_6, window_bounds = array<i64: 16, 1>}, {pipeline_mode = #tpu.pipeline_mode<synchronous>, transform_indices = @transform_7, window_bounds = array<i64: 64, 16>}, {transform_indices = @transform_8, window_bounds = array<i64: 1, 64, 1>}, {transform_indices = @transform_9, window_bounds = array<i64: 1, 64, 1>}]} {
    %c0 = arith.constant 0 : index
    %c0_0 = arith.constant 0 : index
    %c0_1 = arith.constant 0 : index
    %0 = vector.load %arg2[%c0, %c0_0, %c0_1] : memref<1x64x16xf32, #tpu.memory_space<vmem>>, vector<1x64x16xf32>
    %1 = vector.shape_cast %0 : vector<1x64x16xf32> to vector<64x16xf32>
    %2 = arith.index_cast %arg0 : i32 to index
    %3 = memref.load %arg1[%2] : memref<2xi32, #tpu.memory_space<smem>>
    %4 = arith.sitofp %3 : i32 to f32
    %cst = arith.constant 1.000000e+00 : f32
    %5 = arith.divf %cst, %4 : f32
    %6 = tpu.iota {dimensions = array<i32: 1>} : vector<1x16xi32>
    %7 = vector.broadcast %3 : i32 to vector<1x16xi32>
    %8 = arith.cmpi slt, %6, %7 : vector<1x16xi32>
    %cst_2 = arith.constant 0.000000e+00 : f32
    %9 = vector.shape_cast %8 : vector<1x16xi1> to vector<1x16xi1>
    %10 = vector.broadcast %9 : vector<1x16xi1> to vector<64x16xi1>
    %11 = vector.broadcast %cst_2 : f32 to vector<64x16xf32>
    %12 = arith.select %10, %1, %11 : vector<64x16xi1>, vector<64x16xf32>
    %cst_3 = arith.constant dense<0.000000e+00> : vector<64xf32>
    %13 = vector.multi_reduction <add>, %12, %cst_3 [1] : vector<64x16xf32> to vector<64xf32>
    %14 = vector.shape_cast %13 : vector<64xf32> to vector<64x1xf32>
    %15 = vector.broadcast %5 : f32 to vector<64x1xf32>
    %16 = arith.mulf %14, %15 : vector<64x1xf32>
    %17 = vector.broadcast %16 : vector<64x1xf32> to vector<64x16xf32>
    %18 = arith.subf %1, %17 : vector<64x16xf32>
    %19 = arith.mulf %18, %18 : vector<64x16xf32>
    %cst_4 = arith.constant 0.000000e+00 : f32
    %20 = vector.shape_cast %8 : vector<1x16xi1> to vector<1x16xi1>
    %21 = vector.broadcast %20 : vector<1x16xi1> to vector<64x16xi1>
    %22 = vector.broadcast %cst_4 : f32 to vector<64x16xf32>
    %23 = arith.select %21, %19, %22 : vector<64x16xi1>, vector<64x16xf32>
    %cst_5 = arith.constant dense<0.000000e+00> : vector<64xf32>
    %24 = vector.multi_reduction <add>, %23, %cst_5 [1] : vector<64x16xf32> to vector<64xf32>
    %25 = vector.shape_cast %24 : vector<64xf32> to vector<64x1xf32>
    %26 = vector.broadcast %5 : f32 to vector<64x1xf32>
    %27 = arith.mulf %25, %26 : vector<64x1xf32>
    %cst_6 = arith.constant 9.99999996E-13 : f32
    %28 = vector.broadcast %cst_6 : f32 to vector<64x1xf32>
    %29 = arith.maximumf %27, %28 : vector<64x1xf32>
    %30 = math.sqrt %29 : vector<64x1xf32>
    %c0_7 = arith.constant 0 : index
    %c0_8 = arith.constant 0 : index
    %31 = vector.load %arg4[%c0_7, %c0_8] : memref<16x64xf32, #tpu.memory_space<vmem>>, vector<16x64xf32>
    %cst_9 = arith.constant dense<0.000000e+00> : vector<16x1xf32>
    %32 = tpu.matmul %31, %16, %cst_9 {dimension_numbers = #tpu.dot_dimension_numbers<[1], [0], [0], [1], [0, 0, 1, 1], [], []>} : vector<16x64xf32>, vector<64x1xf32>, vector<16x1xf32> -> vector<16x1xf32>
    %c0_10 = arith.constant 0 : index
    %c0_11 = arith.constant 0 : index
    %33 = vector.load %arg5[%c0_10, %c0_11] : memref<16x64xf32, #tpu.memory_space<vmem>>, vector<16x64xf32>
    %cst_12 = arith.constant dense<0.000000e+00> : vector<16x1xf32>
    %34 = tpu.matmul %33, %30, %cst_12 {dimension_numbers = #tpu.dot_dimension_numbers<[1], [0], [0], [1], [0, 0, 1, 1], [], []>} : vector<16x64xf32>, vector<64x1xf32>, vector<16x1xf32> -> vector<16x1xf32>
    %35 = arith.addf %32, %34 : vector<16x1xf32>
    %c0_13 = arith.constant 0 : index
    %c0_14 = arith.constant 0 : index
    %36 = vector.load %arg6[%c0_13, %c0_14] : memref<16x1xf32, #tpu.memory_space<vmem>>, vector<16x1xf32>
    %37 = arith.addf %35, %36 : vector<16x1xf32>
    %c0_15 = arith.constant 0 : index
    %c0_16 = arith.constant 0 : index
    %38 = vector.load %arg3[%c0_15, %c0_16] : memref<16x64xf32, #tpu.memory_space<vmem>>, vector<16x64xf32>
    %cst_17 = arith.constant dense<0.000000e+00> : vector<16x16xf32>
    %39 = tpu.matmul %38, %1, %cst_17 {dimension_numbers = #tpu.dot_dimension_numbers<[1], [0], [0], [1], [0, 0, 1, 1], [], []>} : vector<16x64xf32>, vector<64x16xf32>, vector<16x16xf32> -> vector<16x16xf32>
    %40 = vector.broadcast %37 : vector<16x1xf32> to vector<16x16xf32>
    %41 = arith.addf %39, %40 : vector<16x16xf32>
    %cst_18 = arith.constant 0.000000e+00 : f32
    %42 = vector.broadcast %cst_18 : f32 to vector<16x16xf32>
    %43 = arith.maximumf %41, %42 : vector<16x16xf32>
    %c0_19 = arith.constant 0 : index
    %c0_20 = arith.constant 0 : index
    %44 = vector.load %arg7[%c0_19, %c0_20] : memref<16x1xf32, #tpu.memory_space<vmem>>, vector<16x1xf32>
    %45 = vector.broadcast %44 : vector<16x1xf32> to vector<16x16xf32>
    %46 = arith.mulf %43, %45 : vector<16x16xf32>
    %c0_21 = arith.constant 0 : index
    %c0_22 = arith.constant 0 : index
    %47 = vector.load %arg8[%c0_21, %c0_22] : memref<16x1xf32, #tpu.memory_space<vmem>>, vector<16x1xf32>
    %48 = vector.broadcast %47 : vector<16x1xf32> to vector<16x16xf32>
    %49 = arith.addf %46, %48 : vector<16x16xf32>
    %50 = math.tanh %49 : vector<16x16xf32>
    %c0_23 = arith.constant 0 : index
    %c0_24 = arith.constant 0 : index
    %51 = vector.load %arg9[%c0_23, %c0_24] : memref<64x16xf32, #tpu.memory_space<vmem>>, vector<64x16xf32>
    %cst_25 = arith.constant dense<0.000000e+00> : vector<64x16xf32>
    %52 = tpu.matmul %51, %50, %cst_25 {dimension_numbers = #tpu.dot_dimension_numbers<[1], [0], [0], [1], [0, 0, 1, 1], [], []>} : vector<64x16xf32>, vector<16x16xf32>, vector<64x16xf32> -> vector<64x16xf32>
    %cst_26 = arith.constant -1.000000e+30 : f32
    %53 = vector.shape_cast %8 : vector<1x16xi1> to vector<1x16xi1>
    %54 = vector.broadcast %53 : vector<1x16xi1> to vector<64x16xi1>
    %55 = vector.broadcast %cst_26 : f32 to vector<64x16xf32>
    %56 = arith.select %54, %52, %55 : vector<64x16xi1>, vector<64x16xf32>
    %cst_27 = arith.constant dense<0xFF800000> : vector<64xf32>
    %57 = vector.multi_reduction <maximumf>, %56, %cst_27 [1] : vector<64x16xf32> to vector<64xf32>
    %58 = vector.shape_cast %57 : vector<64xf32> to vector<64x1xf32>
    %59 = vector.broadcast %58 : vector<64x1xf32> to vector<64x16xf32>
    %60 = arith.subf %56, %59 : vector<64x16xf32>
    %61 = math.exp %60 : vector<64x16xf32>
    %cst_28 = arith.constant dense<0.000000e+00> : vector<64xf32>
    %62 = vector.multi_reduction <add>, %61, %cst_28 [1] : vector<64x16xf32> to vector<64xf32>
    %63 = vector.shape_cast %62 : vector<64xf32> to vector<64x1xf32>
    %cst_29 = arith.constant 1.000000e+00 : f32
    %64 = vector.broadcast %cst_29 : f32 to vector<64x1xf32>
    %65 = arith.divf %64, %63 : vector<64x1xf32>
    %66 = arith.mulf %61, %1 : vector<64x16xf32>
    %cst_30 = arith.constant dense<0.000000e+00> : vector<64xf32>
    %67 = vector.multi_reduction <add>, %66, %cst_30 [1] : vector<64x16xf32> to vector<64xf32>
    %68 = vector.shape_cast %67 : vector<64xf32> to vector<64x1xf32>
    %69 = arith.mulf %68, %65 : vector<64x1xf32>
    %70 = vector.broadcast %69 : vector<64x1xf32> to vector<64x16xf32>
    %71 = arith.subf %1, %70 : vector<64x16xf32>
    %72 = arith.mulf %71, %71 : vector<64x16xf32>
    %73 = arith.mulf %61, %72 : vector<64x16xf32>
    %cst_31 = arith.constant dense<0.000000e+00> : vector<64xf32>
    %74 = vector.multi_reduction <add>, %73, %cst_31 [1] : vector<64x16xf32> to vector<64xf32>
    %75 = vector.shape_cast %74 : vector<64xf32> to vector<64x1xf32>
    %76 = arith.mulf %75, %65 : vector<64x1xf32>
    %cst_32 = arith.constant 9.99999996E-13 : f32
    %77 = vector.broadcast %cst_32 : f32 to vector<64x1xf32>
    %78 = arith.maximumf %76, %77 : vector<64x1xf32>
    %79 = math.sqrt %78 : vector<64x1xf32>
    %c0_33 = arith.constant 0 : index
    %c0_34 = arith.constant 0 : index
    %c0_35 = arith.constant 0 : index
    %80 = vector.load %arg10[%c0_33, %c0_34, %c0_35] : memref<1x64x1xf32, #tpu.memory_space<vmem>>, vector<1x64x1xf32>
    %81 = vector.shape_cast %80 : vector<1x64x1xf32> to vector<64x1xf32>
    %82 = vector.shape_cast %69 : vector<64x1xf32> to vector<1x64x1xf32>
    tpu.vector_store %arg10[%c0_33, %c0_34, %c0_35], %82 {strides = array<i32>} : memref<1x64x1xf32, #tpu.memory_space<vmem>>, vector<1x64x1xf32>,
    %c0_36 = arith.constant 0 : index
    %c0_37 = arith.constant 0 : index
    %c0_38 = arith.constant 0 : index
    %83 = vector.load %arg11[%c0_36, %c0_37, %c0_38] : memref<1x64x1xf32, #tpu.memory_space<vmem>>, vector<1x64x1xf32>
    %84 = vector.shape_cast %83 : vector<1x64x1xf32> to vector<64x1xf32>
    %85 = vector.shape_cast %79 : vector<64x1xf32> to vector<1x64x1xf32>
    tpu.vector_store %arg11[%c0_36, %c0_37, %c0_38], %85 {strides = array<i32>} : memref<1x64x1xf32, #tpu.memory_space<vmem>>, vector<1x64x1xf32>,
    return
  }
  func.func @transform_0(%arg0: i32, %arg1: memref<2xi32, #tpu.memory_space<smem>>) -> (i32, i32, i32) {
    %c0_i32 = arith.constant 0 : i32
    %c0_i32_0 = arith.constant 0 : i32
    %c0_i32_1 = arith.constant 0 : i32
    return %arg0, %c0_i32, %c0_i32_0 : i32, i32, i32
  }
  func.func @transform_1(%arg0: i32, %arg1: memref<2xi32, #tpu.memory_space<smem>>) -> (i32, i32) {
    %c0_i32 = arith.constant 0 : i32
    %c0_i32_0 = arith.constant 0 : i32
    %c0_i32_1 = arith.constant 0 : i32
    return %c0_i32, %c0_i32_0 : i32, i32
  }
  func.func @transform_2(%arg0: i32, %arg1: memref<2xi32, #tpu.memory_space<smem>>) -> (i32, i32) {
    %c0_i32 = arith.constant 0 : i32
    %c0_i32_0 = arith.constant 0 : i32
    %c0_i32_1 = arith.constant 0 : i32
    return %c0_i32, %c0_i32_0 : i32, i32
  }
  func.func @transform_3(%arg0: i32, %arg1: memref<2xi32, #tpu.memory_space<smem>>) -> (i32, i32) {
    %c0_i32 = arith.constant 0 : i32
    %c0_i32_0 = arith.constant 0 : i32
    %c0_i32_1 = arith.constant 0 : i32
    return %c0_i32, %c0_i32_0 : i32, i32
  }
  func.func @transform_4(%arg0: i32, %arg1: memref<2xi32, #tpu.memory_space<smem>>) -> (i32, i32) {
    %c0_i32 = arith.constant 0 : i32
    %c0_i32_0 = arith.constant 0 : i32
    %c0_i32_1 = arith.constant 0 : i32
    return %c0_i32, %c0_i32_0 : i32, i32
  }
  func.func @transform_5(%arg0: i32, %arg1: memref<2xi32, #tpu.memory_space<smem>>) -> (i32, i32) {
    %c0_i32 = arith.constant 0 : i32
    %c0_i32_0 = arith.constant 0 : i32
    %c0_i32_1 = arith.constant 0 : i32
    return %c0_i32, %c0_i32_0 : i32, i32
  }
  func.func @transform_6(%arg0: i32, %arg1: memref<2xi32, #tpu.memory_space<smem>>) -> (i32, i32) {
    %c0_i32 = arith.constant 0 : i32
    %c0_i32_0 = arith.constant 0 : i32
    %c0_i32_1 = arith.constant 0 : i32
    return %c0_i32, %c0_i32_0 : i32, i32
  }
  func.func @transform_7(%arg0: i32, %arg1: memref<2xi32, #tpu.memory_space<smem>>) -> (i32, i32) {
    %c0_i32 = arith.constant 0 : i32
    %c0_i32_0 = arith.constant 0 : i32
    %c0_i32_1 = arith.constant 0 : i32
    return %c0_i32, %c0_i32_0 : i32, i32
  }
  func.func @transform_8(%arg0: i32, %arg1: memref<2xi32, #tpu.memory_space<smem>>) -> (i32, i32, i32) {
    %c0_i32 = arith.constant 0 : i32
    %c0_i32_0 = arith.constant 0 : i32
    %c0_i32_1 = arith.constant 0 : i32
    return %arg0, %c0_i32, %c0_i32_0 : i32, i32, i32
  }
  func.func @transform_9(%arg0: i32, %arg1: memref<2xi32, #tpu.memory_space<smem>>) -> (i32, i32, i32) {
    %c0_i32 = arith.constant 0 : i32
    %c0_i32_0 = arith.constant 0 : i32
    %c0_i32_1 = arith.constant 0 : i32
    return %arg0, %c0_i32, %c0_i32_0 : i32, i32, i32
  }
}

</mosaic_0001>

<llo_original>
// kernel: tpu_custom_call.1
$region0: #{tpu_custom_call.1}
  #allocation0 [shape = 'u32[]', space=smem, size = 0x4, offset = 0x4, fixed_abs, tag = 'smem constant byte address 0x4 - core index']
  #allocation1 [shape = 'u32[144,128]{1,0:T(1,128)}', space=vmem, size = 0x12000, scoped, tag = 'internal scratch']
  #allocation2 [shape = 's32[1]{0}', space=sflag, size = 0x4, scoped, tag = 'scoped memory for tpu_custom_call.1']
  #allocation3 [shape = 'u8[512]{0}', space=smem, size = 0x200, scoped, tag = 'prefetched SMEM operand 0']
  %s0 = inlined_call_operand.vmem [shape: s32[2], index: 0, kind: input, shape index: {}]
  %s1 = inlined_call_operand.vmem [shape: f32[2,64,16], index: 1, kind: input, shape index: {}]
  %s2 = inlined_call_operand.vmem [shape: f32[16,64], index: 2, kind: input, shape index: {}]
  %s3 = inlined_call_operand.vmem [shape: f32[16,64], index: 3, kind: input, shape index: {}]
  %s4 = inlined_call_operand.vmem [shape: f32[16,64], index: 4, kind: input, shape index: {}]
  %s5 = inlined_call_operand.vmem [shape: f32[16,1], index: 5, kind: input, shape index: {}]
  %s6 = inlined_call_operand.vmem [shape: f32[16,1], index: 6, kind: input, shape index: {}]
  %s7 = inlined_call_operand.vmem [shape: f32[16,1], index: 7, kind: input, shape index: {}]
  %s8 = inlined_call_operand.vmem [shape: f32[64,16], index: 8, kind: input, shape index: {}]
  %s9 = inlined_call_operand.vmem [shape: f32[2,64,1], index: 9, kind: output, shape index: {0}]
  %s10 = inlined_call_operand.vmem [shape: f32[2,64,1], index: 10, kind: output, shape index: {1}]
  %11 = xla_tuple %s9, %s10
  %s12 = sld [smem:[#allocation0]]
  $region73: #{tpu_custom_call.1} parent=0
    _
  %s14 = ssub.s32 1, %s12
  %s15 = scalar_select 0, %s14, %s12
  %s16 = sshll.u32 %s0, 4
  %s17 = int_to_ptr.vmem [resolvable:$true] %s16
  %19 = dma.vmem_to_smem %s17, 16, [#allocation3], [#allocation2]
  %20 = dma.done [#allocation2], 16
  %21 = sfence
  loop: start=0, step=1, limit=4
  $region2: #{tpu_custom_call.1} parent=0 // loop_pre_header
    _
  $region3: #{tpu_custom_call.1} parent=0 // loop_header
    %s23 = sphi 0, %s27
    %p24 = scmp.ge.s32.totalorder %s23, 4
    %s33 = sphi 0, %s35
    %s36 = sphi 0, %s33
    %s37 = sphi 0, %s36
    %s53 = sphi 0, %s37
    %s57 = sphi 0, %s57
    %s59 = sphi 0, %s57
    %s60 = sphi 0, %s59
    %s74 = sphi 0, %s60
    %s78 = sphi 0, %s78
    %s80 = sphi 0, %s78
    %s81 = sphi 0, %s80
    %s95 = sphi 0, %s81
    %s99 = sphi 0, %s99
    %s101 = sphi 0, %s99
    %s102 = sphi 0, %s101
    %s116 = sphi 0, %s102
    %s120 = sphi 0, %s120
    %s122 = sphi 0, %s120
    %s123 = sphi 0, %s122
    %s137 = sphi 0, %s123
    %s141 = sphi 0, %s141
    %s143 = sphi 0, %s141
    %s144 = sphi 0, %s143
    %s158 = sphi 0, %s144
    %s162 = sphi 0, %s162
    %s164 = sphi 0, %s162
    %s165 = sphi 0, %s164
    %s179 = sphi 0, %s165
    %s183 = sphi 0, %s183
    %s185 = sphi 0, %s183
    %s186 = sphi 0, %s185
    %s200 = sphi 0, %s186
    %s206 = sphi 0, %s208
    %s209 = sphi 0, %s206
    %s210 = sphi 0, %s209
    %s226 = sphi 0, %s210
    %s232 = sphi 0, %s234
    %s235 = sphi 0, %s232
    %s236 = sphi 0, %s235
    %s252 = sphi 0, %s236
  $region4: #{tpu_custom_call.1} parent=0 // loop_header_branch
    %26 = sbr.rel (%p24) target = $region8
  $region5: #{tpu_custom_call.1} parent=0 // loop_body
    %s28 = ssub.s32 %s23, 1
    %s29 = ssub.s32 %s23, 2
    %s30 = sadd.s32 %s23, 1
    %s31 = ssub.s32 %s23, %s30
    %p32 = scmp.eq.s32.totalorder %s31, 0
    %s34 = sadd.s32 %s33, 1
    %s35 = scalar_select %p32, %s33, %s34
    %p38 = pneg %p32
    %p39 = scmp.eq.s32.totalorder %s23, 1
    %p40 = por %p38, %p39
    %p41 = scmp.ne.s32.totalorder %s33, %s36
    %p42 = scmp.eq.s32.totalorder %s23, 0
    %p43 = por %p41, %p42
    %p44 = scmp.ne.s32.totalorder %s33, %s36
    %p45 = scmp.eq.s32.totalorder %s28, 1
    %p46 = por %p44, %p45
    %p47 = scmp.ne.s32.totalorder %s36, %s37
    %p48 = scmp.eq.s32.totalorder %s28, 0
    %p49 = por %p47, %p48
    %p50 = scmp.ne.s32.totalorder %s36, %s37
    %p51 = scmp.eq.s32.totalorder %s29, 1
    %p52 = por %p50, %p51
    %p54 = scmp.ne.s32.totalorder %s37, %s53
    %p55 = scmp.eq.s32.totalorder %s29, 0
    %p56 = por %p54, %p55
    %s58 = sadd.s32 %s57, 1
    %p61 = scmp.eq.s32.totalorder %s23, 1
    %p62 = scmp.ne.s32.totalorder %s57, %s59
    %p63 = scmp.eq.s32.totalorder %s23, 0
    %p64 = por %p62, %p63
    %p65 = scmp.ne.s32.totalorder %s57, %s59
    %p66 = scmp.eq.s32.totalorder %s28, 1
    %p67 = por %p65, %p66
    %p68 = scmp.ne.s32.totalorder %s59, %s60
    %p69 = scmp.eq.s32.totalorder %s28, 0
    %p70 = por %p68, %p69
    %p71 = scmp.ne.s32.totalorder %s59, %s60
    %p72 = scmp.eq.s32.totalorder %s29, 1
    %p73 = por %p71, %p72
    %p75 = scmp.ne.s32.totalorder %s60, %s74
    %p76 = scmp.eq.s32.totalorder %s29, 0
    %p77 = por %p75, %p76
    %s79 = sadd.s32 %s78, 1
    %p82 = scmp.eq.s32.totalorder %s23, 1
    %p83 = scmp.ne.s32.totalorder %s78, %s80
    %p84 = scmp.eq.s32.totalorder %s23, 0
    %p85 = por %p83, %p84
    %p86 = scmp.ne.s32.totalorder %s78, %s80
    %p87 = scmp.eq.s32.totalorder %s28, 1
    %p88 = por %p86, %p87
    %p89 = scmp.ne.s32.totalorder %s80, %s81
    %p90 = scmp.eq.s32.totalorder %s28, 0
    %p91 = por %p89, %p90
    %p92 = scmp.ne.s32.totalorder %s80, %s81
    %p93 = scmp.eq.s32.totalorder %s29, 1
    %p94 = por %p92, %p93
    %p96 = scmp.ne.s32.totalorder %s81, %s95
    %p97 = scmp.eq.s32.totalorder %s29, 0
    %p98 = por %p96, %p97
    %s100 = sadd.s32 %s99, 1
    %p103 = scmp.eq.s32.totalorder %s23, 1
    %p104 = scmp.ne.s32.totalorder %s99, %s101
    %p105 = scmp.eq.s32.totalorder %s23, 0
    %p106 = por %p104, %p105
    %p107 = scmp.ne.s32.totalorder %s99, %s101
    %p108 = scmp.eq.s32.totalorder %s28, 1
    %p109 = por %p107, %p108
    %p110 = scmp.ne.s32.totalorder %s101, %s102
    %p111 = scmp.eq.s32.totalorder %s28, 0
    %p112 = por %p110, %p111
    %p113 = scmp.ne.s32.totalorder %s101, %s102
    %p114 = scmp.eq.s32.totalorder %s29, 1
    %p115 = por %p113, %p114
    %p117 = scmp.ne.s32.totalorder %s102, %s116
    %p118 = scmp.eq.s32.totalorder %s29, 0
    %p119 = por %p117, %p118
    %s121 = sadd.s32 %s120, 1
    %p124 = scmp.eq.s32.totalorder %s23, 1
    %p125 = scmp.ne.s32.totalorder %s120, %s122
    %p126 = scmp.eq.s32.totalorder %s23, 0
    %p127 = por %p125, %p126
    %p128 = scmp.ne.s32.totalorder %s120, %s122
    %p129 = scmp.eq.s32.totalorder %s28, 1
    %p130 = por %p128, %p129
    %p131 = scmp.ne.s32.totalorder %s122, %s123
    %p132 = scmp.eq.s32.totalorder %s28, 0
    %p133 = por %p131, %p132
    %p134 = scmp.ne.s32.totalorder %s122, %s123
    %p135 = scmp.eq.s32.totalorder %s29, 1
    %p136 = por %p134, %p135
    %p138 = scmp.ne.s32.totalorder %s123, %s137
    %p139 = scmp.eq.s32.totalorder %s29, 0
    %p140 = por %p138, %p139
    %s142 = sadd.s32 %s141, 1
    %p145 = scmp.eq.s32.totalorder %s23, 1
    %p146 = scmp.ne.s32.totalorder %s141, %s143
    %p147 = scmp.eq.s32.totalorder %s23, 0
    %p148 = por %p146, %p147
    %p149 = scmp.ne.s32.totalorder %s141, %s143
    %p150 = scmp.eq.s32.totalorder %s28, 1
    %p151 = por %p149, %p150
    %p152 = scmp.ne.s32.totalorder %s143, %s144
    %p153 = scmp.eq.s32.totalorder %s28, 0
    %p154 = por %p152, %p153
    %p155 = scmp.ne.s32.totalorder %s143, %s144
    %p156 = scmp.eq.s32.totalorder %s29, 1
    %p157 = por %p155, %p156
    %p159 = scmp.ne.s32.totalorder %s144, %s158
    %p160 = scmp.eq.s32.totalorder %s29, 0
    %p161 = por %p159, %p160
    %s163 = sadd.s32 %s162, 1
    %p166 = scmp.eq.s32.totalorder %s23, 1
    %p167 = scmp.ne.s32.totalorder %s162, %s164
    %p168 = scmp.eq.s32.totalorder %s23, 0
    %p169 = por %p167, %p168
    %p170 = scmp.ne.s32.totalorder %s162, %s164
    %p171 = scmp.eq.s32.totalorder %s28, 1
    %p172 = por %p170, %p171
    %p173 = scmp.ne.s32.totalorder %s164, %s165
    %p174 = scmp.eq.s32.totalorder %s28, 0
    %p175 = por %p173, %p174
    %p176 = scmp.ne.s32.totalorder %s164, %s165
    %p177 = scmp.eq.s32.totalorder %s29, 1
    %p178 = por %p176, %p177
    %p180 = scmp.ne.s32.totalorder %s165, %s179
    %p181 = scmp.eq.s32.totalorder %s29, 0
    %p182 = por %p180, %p181
    %s184 = sadd.s32 %s183, 1
    %p187 = scmp.eq.s32.totalorder %s23, 1
    %p188 = scmp.ne.s32.totalorder %s183, %s185
    %p189 = scmp.eq.s32.totalorder %s23, 0
    %p190 = por %p188, %p189
    %p191 = scmp.ne.s32.totalorder %s183, %s185
    %p192 = scmp.eq.s32.totalorder %s28, 1
    %p193 = por %p191, %p192
    %p194 = scmp.ne.s32.totalorder %s185, %s186
    %p195 = scmp.eq.s32.totalorder %s28, 0
    %p196 = por %p194, %p195
    %p197 = scmp.ne.s32.totalorder %s185, %s186
    %p198 = scmp.eq.s32.totalorder %s29, 1
    %p199 = por %p197, %p198
    %p201 = scmp.ne.s32.totalorder %s186, %s200
    %p202 = scmp.eq.s32.totalorder %s29, 0
    %p203 = por %p201, %p202
    %s204 = ssub.s32 %s23, %s30
    %p205 = scmp.eq.s32.totalorder %s204, 0
    %s207 = sadd.s32 %s206, 1
    %s208 = scalar_select %p205, %s206, %s207
    %p211 = pneg %p205
    %p212 = scmp.eq.s32.totalorder %s23, 1
    %p213 = por %p211, %p212
    %p214 = scmp.ne.s32.totalorder %s206, %s209
    %p215 = scmp.eq.s32.totalorder %s23, 0
    %p216 = por %p214, %p215
    %p217 = scmp.ne.s32.totalorder %s206, %s209
    %p218 = scmp.eq.s32.totalorder %s28, 1
    %p219 = por %p217, %p218
    %p220 = scmp.ne.s32.totalorder %s209, %s210
    %p221 = scmp.eq.s32.totalorder %s28, 0
    %p222 = por %p220, %p221
    %p223 = scmp.ne.s32.totalorder %s209, %s210
    %p224 = scmp.eq.s32.totalorder %s29, 1
    %p225 = por %p223, %p224
    %p227 = scmp.ne.s32.totalorder %s210, %s226
    %p228 = scmp.eq.s32.totalorder %s29, 0
    %p229 = por %p227, %p228
    %s230 = ssub.s32 %s23, %s30
    %p231 = scmp.eq.s32.totalorder %s230, 0
    %s233 = sadd.s32 %s232, 1
    %s234 = scalar_select %p231, %s232, %s233
    %p237 = pneg %p231
    %p238 = scmp.eq.s32.totalorder %s23, 1
    %p239 = por %p237, %p238
    %p240 = scmp.ne.s32.totalorder %s232, %s235
    %p241 = scmp.eq.s32.totalorder %s23, 0
    %p242 = por %p240, %p241
    %p243 = scmp.ne.s32.totalorder %s232, %s235
    %p244 = scmp.eq.s32.totalorder %s28, 1
    %p245 = por %p243, %p244
    %p246 = scmp.ne.s32.totalorder %s235, %s236
    %p247 = scmp.eq.s32.totalorder %s28, 0
    %p248 = por %p246, %p247
    %p249 = scmp.ne.s32.totalorder %s235, %s236
    %p250 = scmp.eq.s32.totalorder %s29, 1
    %p251 = por %p249, %p250
    %p253 = scmp.ne.s32.totalorder %s236, %s252
    %p254 = scmp.eq.s32.totalorder %s29, 0
    %p255 = por %p253, %p254
    %p256 = scmp.le.s32.totalorder 1, %s23
    %p257 = scmp.lt.s32.totalorder %s23, 3
    %p258 = pnand %p256, %p257
    %p259 = pneg %p258
    // Predicated region
    $region9: #{tpu_custom_call.1} parent=5 // pred_check
      _
    $region10: #{tpu_custom_call.1} parent=5 // pred_check_branch
      %261 = sbr.rel (%p258) target = $region12
    $region11: #{tpu_custom_call.1} parent=5 // pred_region
      %s262 = ssub.s32 %s23, 1
      // Predicated region
      $region13: #{tpu_custom_call.1} parent=11 // pred_check
        %p263 = pneg %p70
      $region14: #{tpu_custom_call.1} parent=11 // pred_check_branch
        %265 = sbr.rel (%p263) target = $region16
      $region15: #{tpu_custom_call.1} parent=11 // pred_region
        _
      $region16: #{tpu_custom_call.1} parent=11 // pred_fallthru
        _
      // Predicated region
      $region17: #{tpu_custom_call.1} parent=11 // pred_check
        %p266 = pneg %p91
      $region18: #{tpu_custom_call.1} parent=11 // pred_check_branch
        %268 = sbr.rel (%p266) target = $region20
      $region19: #{tpu_custom_call.1} parent=11 // pred_region
        _
      $region20: #{tpu_custom_call.1} parent=11 // pred_fallthru
        _
      // Predicated region
      $region21: #{tpu_custom_call.1} parent=11 // pred_check
        %p269 = pneg %p112
      $region22: #{tpu_custom_call.1} parent=11 // pred_check_branch
        %271 = sbr.rel (%p269) target = $region24
      $region23: #{tpu_custom_call.1} parent=11 // pred_region
        _
      $region24: #{tpu_custom_call.1} parent=11 // pred_fallthru
        _
      // Predicated region
      $region25: #{tpu_custom_call.1} parent=11 // pred_check
        %p272 = pneg %p133
      $region26: #{tpu_custom_call.1} parent=11 // pred_check_branch
        %274 = sbr.rel (%p272) target = $region28
      $region27: #{tpu_custom_call.1} parent=11 // pred_region
        _
      $region28: #{tpu_custom_call.1} parent=11 // pred_fallthru
        _
      // Predicated region
      $region29: #{tpu_custom_call.1} parent=11 // pred_check
        %p275 = pneg %p154
      $region30: #{tpu_custom_call.1} parent=11 // pred_check_branch
        %277 = sbr.rel (%p275) target = $region32
      $region31: #{tpu_custom_call.1} parent=11 // pred_region
        _
      $region32: #{tpu_custom_call.1} parent=11 // pred_fallthru
        _
      // Predicated region
      $region33: #{tpu_custom_call.1} parent=11 // pred_check
        %p278 = pneg %p175
      $region34: #{tpu_custom_call.1} parent=11 // pred_check_branch
        %280 = sbr.rel (%p278) target = $region36
      $region35: #{tpu_custom_call.1} parent=11 // pred_region
        _
      $region36: #{tpu_custom_call.1} parent=11 // pred_fallthru
        _
      // Predicated region
      $region37: #{tpu_custom_call.1} parent=11 // pred_check
        %p281 = pneg %p196
      $region38: #{tpu_custom_call.1} parent=11 // pred_check_branch
        %283 = sbr.rel (%p281) target = $region40
      $region39: #{tpu_custom_call.1} parent=11 // pred_region
        _
      $region40: #{tpu_custom_call.1} parent=11 // pred_fallthru
        _
    $region12: #{tpu_custom_call.1} parent=5 // pred_fallthru
      _
    %p284 = scmp.lt.s32.totalorder %s23, 2
    // Predicated region
    $region41: #{tpu_custom_call.1} parent=5 // pred_check
      %p285 = pneg %p284
    $region42: #{tpu_custom_call.1} parent=5 // pred_check_branch
      %287 = sbr.rel (%p285) target = $region44
    $region43: #{tpu_custom_call.1} parent=5 // pred_region
      // Predicated region
      $region45: #{tpu_custom_call.1} parent=43 // pred_check
        %p288 = pneg %p43
      $region46: #{tpu_custom_call.1} parent=43 // pred_check_branch
        %290 = sbr.rel (%p288) target = $region48
      $region47: #{tpu_custom_call.1} parent=43 // pred_region
        %p291 = scmp.lt.s32.totalorder %s23, 1
        %s292 = scalar_select %p291, %s23, 1
        %s293 = smul.addr %s292, 8
        %s294 = smul.addr %s293, 8
        %s295 = scalar_lea.vmem %s1, %s294
      $region48: #{tpu_custom_call.1} parent=43 // pred_fallthru
        _
    $region44: #{tpu_custom_call.1} parent=5 // pred_fallthru
      _
    %p296 = scmp.le.s32.totalorder 1, %s23
    %p297 = scmp.lt.s32.totalorder %s23, 3
    %p298 = pnand %p296, %p297
    %p299 = pneg %p298
    // Predicated region
    $region49: #{tpu_custom_call.1} parent=5 // pred_check
      _
    $region50: #{tpu_custom_call.1} parent=5 // pred_check_branch
      %301 = sbr.rel (%p298) target = $region52
    $region51: #{tpu_custom_call.1} parent=5 // pred_region
      %s302 = ssub.s32 %s23, 1
      %p303 = scmp.lt.s32.totalorder %s28, 1
      %s304 = scalar_select %p303, %s28, 1
      %s305 = smul.addr %s304, 8
      %s306 = smul.addr %s305, 8
      %s307 = scalar_lea.vmem %s1, %s306
      %p308 = pneg %p49
      %p309 = pneg %p46
      %p310 = pneg %p70
      %p311 = pneg %p67
      %p312 = pneg %p91
      %p313 = pneg %p88
      %p314 = pneg %p112
      %p315 = pneg %p109
      %p316 = pneg %p133
      %p317 = pneg %p130
      %p318 = pneg %p154
      %p319 = pneg %p151
      %p320 = pneg %p175
      %p321 = pneg %p172
      %p322 = pneg %p196
      %p323 = pneg %p193
      %p324 = pneg %p222
      %p325 = pneg %p219
      %p326 = scmp.lt.s32.totalorder %s28, 1
      %s327 = scalar_select %p326, %s28, 1
      %s328 = smul.addr %s327, 8
      %s329 = smul.addr %s328, 8
      %s330 = scalar_lea.vmem %s9, %s329
      %p331 = pneg %p248
      %p332 = pneg %p245
      %p333 = scmp.lt.s32.totalorder %s28, 1
      %s334 = scalar_select %p333, %s28, 1
      %s335 = smul.addr %s334, 8
      %s336 = smul.addr %s335, 8
      %s337 = scalar_lea.vmem %s10, %s336
      %p338 = scmp.lt.s32.totalorder %s28, 1
      %s339 = scalar_select %p338, %s28, 1
      %s340 = smul.addr %s339, 8
      %s341 = smul.addr %s340, 8
      %s342 = scalar_lea.vmem %s1, %s341
      %p343 = scmp.lt.s32.totalorder %s28, 1
      %s344 = scalar_select %p343, %s28, 1
      %s345 = smul.addr %s344, 8
      %s346 = smul.addr %s345, 8
      %s347 = scalar_lea.vmem %s9, %s346
      %p348 = scmp.lt.s32.totalorder %s28, 1
      %s349 = scalar_select %p348, %s28, 1
      %s350 = smul.addr %s349, 8
      %s351 = smul.addr %s350, 8
      %s352 = scalar_lea.vmem %s10, %s351
      %v353 = vld [vmem:[%s342] sm:$0xff]
      %v354 = vld [vmem:[%s342 + $0x8] sm:$0xff]
      %v355 = vld [vmem:[%s342 + $0x10] sm:$0xff]
      %v356 = vld [vmem:[%s342 + $0x18] sm:$0xff]
      %v357 = vld [vmem:[%s342 + $0x20] sm:$0xff]
      %v358 = vld [vmem:[%s342 + $0x28] sm:$0xff]
      %v359 = vld [vmem:[%s342 + $0x30] sm:$0xff]
      %v360 = vld [vmem:[%s342 + $0x38] sm:$0xff]
      %s361 = sld [smem:[#allocation3 + %s28]]
      %s362 = scvt.s32.f32 %s361
      %v363 = vstv %s362
      %v364 = vrcp.pop %v363
      %s365 = vtos %v364
      %v366 = vlaneseq
      %v367 = vand.u32 %v366, 127
      %v368 = vstv %s361
      %vm369 = vcmp.lt.s32.totalorder %v367, %v368
      %v370 = vsel %vm369, 1, 0
      %vm371 = vcmp.eq.s32.totalorder %v370, 1
      %v372 = vsel %vm371, %v353, 0.0
      %v373 = vsel %vm371, %v354, 0.0
      %v374 = vsel %vm371, %v355, 0.0
      %v375 = vsel %vm371, %v356, 0.0
      %v376 = vsel %vm371, %v357, 0.0
      %v377 = vsel %vm371, %v358, 0.0
      %v378 = vsel %vm371, %v359, 0.0
      %v379 = vsel %vm371, %v360, 0.0
      %vm380 = vcmask 130048
      %v381 = vsel %vm380, %v372, 0.0
      %382 = vadd.xlane.f32.xlu0 %v381
      %v383 = vpop.xlane.xlu0 %382
      %v384 = vsel %vm380, %v373, 0.0
      %385 = vadd.xlane.f32.xlu0 %v384
      %v386 = vpop.xlane.xlu0 %385
      %v387 = vsel %vm380, %v374, 0.0
      %388 = vadd.xlane.f32.xlu0 %v387
      %v389 = vpop.xlane.xlu0 %388
      %v390 = vsel %vm380, %v375, 0.0
      %391 = vadd.xlane.f32.xlu0 %v390
      %v392 = vpop.xlane.xlu0 %391
      %v393 = vsel %vm380, %v376, 0.0
      %394 = vadd.xlane.f32.xlu0 %v393
      %v395 = vpop.xlane.xlu0 %394
      %v396 = vsel %vm380, %v377, 0.0
      %397 = vadd.xlane.f32.xlu0 %v396
      %v398 = vpop.xlane.xlu0 %397
      %v399 = vsel %vm380, %v378, 0.0
      %400 = vadd.xlane.f32.xlu0 %v399
      %v401 = vpop.xlane.xlu0 %400
      %v402 = vsel %vm380, %v379, 0.0
      %403 = vadd.xlane.f32.xlu0 %v402
      %v404 = vpop.xlane.xlu0 %403
      %v405 = vstv %s365
      %v406 = vmul.f32 %v383, %v405
      %v407 = vmul.f32 %v386, %v405
      %v408 = vmul.f32 %v389, %v405
      %v409 = vmul.f32 %v392, %v405
      %v410 = vmul.f32 %v395, %v405
      %v411 = vmul.f32 %v398, %v405
      %v412 = vmul.f32 %v401, %v405
      %v413 = vmul.f32 %v404, %v405
      %v414 = vsub.f32 %v353, %v406
      %v415 = vsub.f32 %v354, %v407
      %v416 = vsub.f32 %v355, %v408
      %v417 = vsub.f32 %v356, %v409
      %v418 = vsub.f32 %v357, %v410
      %v419 = vsub.f32 %v358, %v411
      %v420 = vsub.f32 %v359, %v412
      %v421 = vsub.f32 %v360, %v413
      %v422 = vmul.f32 %v414, %v414
      %v423 = vmul.f32 %v415, %v415
      %v424 = vmul.f32 %v416, %v416
      %v425 = vmul.f32 %v417, %v417
      %v426 = vmul.f32 %v418, %v418
      %v427 = vmul.f32 %v419, %v419
      %v428 = vmul.f32 %v420, %v420
      %v429 = vmul.f32 %v421, %v421
      %v430 = vsel %vm371, %v422, 0.0
      %v431 = vsel %vm371, %v423, 0.0
      %v432 = vsel %vm371, %v424, 0.0
      %v433 = vsel %vm371, %v425, 0.0
      %v434 = vsel %vm371, %v426, 0.0
      %v435 = vsel %vm371, %v427, 0.0
      %v436 = vsel %vm371, %v428, 0.0
      %v437 = vsel %vm371, %v429, 0.0
      %v438 = vsel %vm380, %v430, 0.0
      %439 = vadd.xlane.f32.xlu0 %v438
      %v440 = vpop.xlane.xlu0 %439
      %v441 = vsel %vm380, %v431, 0.0
      %442 = vadd.xlane.f32.xlu0 %v441
      %v443 = vpop.xlane.xlu0 %442
      %v444 = vsel %vm380, %v432, 0.0
      %445 = vadd.xlane.f32.xlu0 %v444
      %v446 = vpop.xlane.xlu0 %445
      %v447 = vsel %vm380, %v433, 0.0
      %448 = vadd.xlane.f32.xlu0 %v447
      %v449 = vpop.xlane.xlu0 %448
      %v450 = vsel %vm380, %v434, 0.0
      %451 = vadd.xlane.f32.xlu0 %v450
      %v452 = vpop.xlane.xlu0 %451
      %v453 = vsel %vm380, %v435, 0.0
      %454 = vadd.xlane.f32.xlu0 %v453
      %v455 = vpop.xlane.xlu0 %454
      %v456 = vsel %vm380, %v436, 0.0
      %457 = vadd.xlane.f32.xlu0 %v456
      %v458 = vpop.xlane.xlu0 %457
      %v459 = vsel %vm380, %v437, 0.0
      %460 = vadd.xlane.f32.xlu0 %v459
      %v461 = vpop.xlane.xlu0 %460
      %v462 = vmul.f32 %v440, %v405
      %v463 = vmul.f32 %v443, %v405
      %v464 = vmul.f32 %v446, %v405
      %v465 = vmul.f32 %v449, %v405
      %v466 = vmul.f32 %v452, %v405
      %v467 = vmul.f32 %v455, %v405
      %v468 = vmul.f32 %v458, %v405
      %v469 = vmul.f32 %v461, %v405
      %v470 = vmax.f32 %v462, 1e-12
      %v471 = vmax.f32 %v463, 1e-12
      %v472 = vmax.f32 %v464, 1e-12
      %v473 = vmax.f32 %v465, 1e-12
      %v474 = vmax.f32 %v466, 1e-12
      %v475 = vmax.f32 %v467, 1e-12
      %v476 = vmax.f32 %v468, 1e-12
      %v477 = vmax.f32 %v469, 1e-12
      %v478 = vrsqrt.pop %v470
      %v479 = vmul.f32 %v470, %v478
      %vm480 = vcmp.eq.f32.partialorder %v470, inf
      %v481 = vsel %vm480, %v470, %v479
      %vm482 = vcmp.eq.f32.partialorder %v470, 0.0
      %v483 = vand.u32 %v470, 2147483648
      %v484 = vsel %vm482, %v483, %v481
      %v485 = vrsqrt.pop %v471
      %v486 = vmul.f32 %v471, %v485
      %vm487 = vcmp.eq.f32.partialorder %v471, inf
      %v488 = vsel %vm487, %v471, %v486
      %vm489 = vcmp.eq.f32.partialorder %v471, 0.0
      %v490 = vand.u32 %v471, 2147483648
      %v491 = vsel %vm489, %v490, %v488
      %v492 = vrsqrt.pop %v472
      %v493 = vmul.f32 %v472, %v492
      %vm494 = vcmp.eq.f32.partialorder %v472, inf
      %v495 = vsel %vm494, %v472, %v493
      %vm496 = vcmp.eq.f32.partialorder %v472, 0.0
      %v497 = vand.u32 %v472, 2147483648
      %v498 = vsel %vm496, %v497, %v495
      %v499 = vrsqrt.pop %v473
      %v500 = vmul.f32 %v473, %v499
      %vm501 = vcmp.eq.f32.partialorder %v473, inf
      %v502 = vsel %vm501, %v473, %v500
      %vm503 = vcmp.eq.f32.partialorder %v473, 0.0
      %v504 = vand.u32 %v473, 2147483648
      %v505 = vsel %vm503, %v504, %v502
      %v506 = vrsqrt.pop %v474
      %v507 = vmul.f32 %v474, %v506
      %vm508 = vcmp.eq.f32.partialorder %v474, inf
      %v509 = vsel %vm508, %v474, %v507
      %vm510 = vcmp.eq.f32.partialorder %v474, 0.0
      %v511 = vand.u32 %v474, 2147483648
      %v512 = vsel %vm510, %v511, %v509
      %v513 = vrsqrt.pop %v475
      %v514 = vmul.f32 %v475, %v513
      %vm515 = vcmp.eq.f32.partialorder %v475, inf
      %v516 = vsel %vm515, %v475, %v514
      %vm517 = vcmp.eq.f32.partialorder %v475, 0.0
      %v518 = vand.u32 %v475, 2147483648
      %v519 = vsel %vm517, %v518, %v516
      %v520 = vrsqrt.pop %v476
      %v521 = vmul.f32 %v476, %v520
      %vm522 = vcmp.eq.f32.partialorder %v476, inf
      %v523 = vsel %vm522, %v476, %v521
      %vm524 = vcmp.eq.f32.partialorder %v476, 0.0
      %v525 = vand.u32 %v476, 2147483648
      %v526 = vsel %vm524, %v525, %v523
      %v527 = vrsqrt.pop %v477
      %v528 = vmul.f32 %v477, %v527
      %vm529 = vcmp.eq.f32.partialorder %v477, inf
      %v530 = vsel %vm529, %v477, %v528
      %vm531 = vcmp.eq.f32.partialorder %v477, 0.0
      %v532 = vand.u32 %v477, 2147483648
      %v533 = vsel %vm531, %v532, %v530
      %v534 = vld [vmem:[%s3] sm:$0xff]
      %v535 = vld [vmem:[%s3 + $0x8] sm:$0xff]
      %v536 = vld [vmem:[%s4] sm:$0xff]
      %v537 = vld [vmem:[%s4 + $0x8] sm:$0xff]
      %vm538 = vcmask 523264
      %v540 = vsel %vm538, %v536, 0
      %v543 = vsel %vm538, %v537, 0
      %545 = vmatprep.subr.mxu0 0.0
      %546 = vmatpush1.msra.mxu0 0.0
      %547 = vmatprep.subr.mxu0 0.0
      %548 = vmatpush1.msra.mxu0 0.0
      %549 = vmatprep.subr.mxu0 0.0
      %550 = vmatpush1.msra.mxu0 0.0
      %551 = vmatprep.subr.mxu0 0.0
      %552 = vmatpush1.msra.mxu0 0.0
      %553 = vmatprep.subr.mxu0 0.0
      %554 = vmatpush1.msra.mxu0 0.0
      %555 = vmatprep.subr.mxu0 0.0
      %556 = vmatpush1.msra.mxu0 0.0
      %557 = vmatprep.subr.mxu0 0.0
      %558 = vmatpush1.msra.mxu0 0.0
      %559 = vmatprep.subr.mxu0 0.0
      %560 = vmatpush1.msra.mxu0 0.0
      %561 = vmatprep.subr.mxu0 0.0
      %562 = vmatpush1.msra.mxu0 %v533
      %563 = vmatprep.subr.mxu0 0.0
      %564 = vmatpush1.msra.mxu0 %v526
      %565 = vmatprep.subr.mxu0 0.0
      %566 = vmatpush1.msra.mxu0 %v519
      %567 = vmatprep.subr.mxu0 0.0
      %568 = vmatpush1.msra.mxu0 %v512
      %569 = vmatprep.subr.mxu0 0.0
      %570 = vmatpush1.msra.mxu0 %v505
      %571 = vmatprep.subr.mxu0 0.0
      %572 = vmatpush1.msra.mxu0 %v498
      %573 = vmatprep.subr.mxu0 0.0
      %574 = vmatpush1.msra.mxu0 %v491
      %575 = vmatprep.subr.mxu0 0.0
      %576 = vmatpush1.msra.mxu0 %v484
      %577 = vmatprep.subr.mxu0 0.0
      %578 = vmatpush2.msra.mxu0 0.0
      %579 = vmatprep.subr.mxu0 0.0
      %580 = vmatpush2.msra.mxu0 0.0
      %581 = vmatprep.subr.mxu0 0.0
      %582 = vmatpush2.msra.mxu0 0.0
      %583 = vmatprep.subr.mxu0 0.0
      %584 = vmatpush2.msra.mxu0 0.0
      %585 = vmatprep.subr.mxu0 0.0
      %586 = vmatpush2.msra.mxu0 0.0
      %587 = vmatprep.subr.mxu0 0.0
      %588 = vmatpush2.msra.mxu0 0.0
      %589 = vmatprep.subr.mxu0 0.0
      %590 = vmatpush2.msra.mxu0 0.0
      %591 = vmatprep.subr.mxu0 0.0
      %592 = vmatpush2.msra.mxu0 0.0
      %593 = vmatprep.subr.mxu0 0.0
      %594 = vmatpush2.msra.mxu0 0.0
      %595 = vmatprep.subr.mxu0 0.0
      %596 = vmatpush2.msra.mxu0 0.0
      %597 = vmatprep.subr.mxu0 0.0
      %598 = vmatpush2.msra.mxu0 0.0
      %599 = vmatprep.subr.mxu0 0.0
      %600 = vmatpush2.msra.mxu0 0.0
      %601 = vmatprep.subr.mxu0 0.0
      %602 = vmatpush2.msra.mxu0 0.0
      %603 = vmatprep.subr.mxu0 0.0
      %604 = vmatpush2.msra.mxu0 0.0
      %605 = vmatprep.subr.mxu0 0.0
      %606 = vmatpush2.msra.mxu0 0.0
      %607 = vmatprep.subr.mxu0 0.0
      %608 = vmatpush2.msra.mxu0 0.0
      %609 = vmatprep.mubr.f32.mxu0 0.0
      %610 = vmatmul.mubr.f32.gmra.mxu0 %v540
      %v611 = vpop.f32.mrf.mxu0
      %v612 = vadd.f32 0.0, %v611
      %v613 = vpop.f32.mrf.mxu0
      %614 = vmatprep.mubr.f32.mxu0 0.0
      %615 = vmatmul.mubr.f32.gmra.mxu0 %v543
      %v616 = vpop.f32.mrf.mxu0
      %v617 = vadd.f32 0.0, %v616
      %v618 = vpop.f32.mrf.mxu0
      %619 = vdwg.mxu0
      %v621 = vsel %vm538, %v534, 0
      %v624 = vsel %vm538, %v535, 0
      %626 = vmatprep.subr.mxu0 0.0
      %627 = vmatpush1.msra.mxu0 0.0
      %628 = vmatprep.subr.mxu0 0.0
      %629 = vmatpush1.msra.mxu0 0.0
      %630 = vmatprep.subr.mxu0 0.0
      %631 = vmatpush1.msra.mxu0 0.0
      %632 = vmatprep.subr.mxu0 0.0
      %633 = vmatpush1.msra.mxu0 0.0
      %634 = vmatprep.subr.mxu0 0.0
      %635 = vmatpush1.msra.mxu0 0.0
      %636 = vmatprep.subr.mxu0 0.0
      %637 = vmatpush1.msra.mxu0 0.0
      %638 = vmatprep.subr.mxu0 0.0
      %639 = vmatpush1.msra.mxu0 0.0
      %640 = vmatprep.subr.mxu0 0.0
      %641 = vmatpush1.msra.mxu0 0.0
      %642 = vmatprep.subr.mxu0 0.0
      %643 = vmatpush1.msra.mxu0 %v413
      %644 = vmatprep.subr.mxu0 0.0
      %645 = vmatpush1.msra.mxu0 %v412
      %646 = vmatprep.subr.mxu0 0.0
      %647 = vmatpush1.msra.mxu0 %v411
      %648 = vmatprep.subr.mxu0 0.0
      %649 = vmatpush1.msra.mxu0 %v410
      %650 = vmatprep.subr.mxu0 0.0
      %651 = vmatpush1.msra.mxu0 %v409
      %652 = vmatprep.subr.mxu0 0.0
      %653 = vmatpush1.msra.mxu0 %v408
      %654 = vmatprep.subr.mxu0 0.0
      %655 = vmatpush1.msra.mxu0 %v407
      %656 = vmatprep.subr.mxu0 0.0
      %657 = vmatpush1.msra.mxu0 %v406
      %658 = vmatprep.subr.mxu0 0.0
      %659 = vmatpush2.msra.mxu0 0.0
      %660 = vmatprep.subr.mxu0 0.0
      %661 = vmatpush2.msra.mxu0 0.0
      %662 = vmatprep.subr.mxu0 0.0
      %663 = vmatpush2.msra.mxu0 0.0
      %664 = vmatprep.subr.mxu0 0.0
      %665 = vmatpush2.msra.mxu0 0.0
      %666 = vmatprep.subr.mxu0 0.0
      %667 = vmatpush2.msra.mxu0 0.0
      %668 = vmatprep.subr.mxu0 0.0
      %669 = vmatpush2.msra.mxu0 0.0
      %670 = vmatprep.subr.mxu0 0.0
      %671 = vmatpush2.msra.mxu0 0.0
      %672 = vmatprep.subr.mxu0 0.0
      %673 = vmatpush2.msra.mxu0 0.0
      %674 = vmatprep.subr.mxu0 0.0
      %675 = vmatpush2.msra.mxu0 0.0
      %676 = vmatprep.subr.mxu0 0.0
      %677 = vmatpush2.msra.mxu0 0.0
      %678 = vmatprep.subr.mxu0 0.0
      %679 = vmatpush2.msra.mxu0 0.0
      %680 = vmatprep.subr.mxu0 0.0
      %681 = vmatpush2.msra.mxu0 0.0
      %682 = vmatprep.subr.mxu0 0.0
      %683 = vmatpush2.msra.mxu0 0.0
      %684 = vmatprep.subr.mxu0 0.0
      %685 = vmatpush2.msra.mxu0 0.0
      %686 = vmatprep.subr.mxu0 0.0
      %687 = vmatpush2.msra.mxu0 0.0
      %688 = vmatprep.subr.mxu0 0.0
      %689 = vmatpush2.msra.mxu0 0.0
      %690 = vmatprep.mubr.f32.mxu0 0.0
      %691 = vmatmul.mubr.f32.gmra.mxu0 %v621
      %v692 = vpop.f32.mrf.mxu0
      %v693 = vadd.f32 %v612, %v692
      %v694 = vpop.f32.mrf.mxu0
      %695 = vmatprep.mubr.f32.mxu0 0.0
      %696 = vmatmul.mubr.f32.gmra.mxu0 %v624
      %v697 = vpop.f32.mrf.mxu0
      %v698 = vadd.f32 %v617, %v697
      %v699 = vpop.f32.mrf.mxu0
      %700 = vdwg.mxu0
      %v701 = vld [vmem:[%s5] sm:$0xff]
      %v702 = vld [vmem:[%s5 + $0x8] sm:$0xff]
      %v703 = vadd.f32 %v693, %v701
      %v704 = vadd.f32 %v698, %v702
      %v705 = vld [vmem:[%s2] sm:$0xff]
      %v706 = vld [vmem:[%s2 + $0x8] sm:$0xff]
      %708 = vset.pattern.permute.xlu0 0
      %709 = vperm.xlu0 %708, %v703
      %v710 = vpop.permute.xlu0 %709
      %713 = vset.pattern.permute.xlu0 0
      %714 = vperm.xlu0 %713, %v704
      %v715 = vpop.permute.xlu0 %714
      %v718 = vsel %vm538, %v705, 0
      %v721 = vsel %vm538, %v706, 0
      %723 = vmatprep.subr.mxu0 0.0
      %724 = vmatpush1.msra.mxu0 0.0
      %725 = vmatprep.subr.mxu0 0.0
      %726 = vmatpush1.msra.mxu0 0.0
      %727 = vmatprep.subr.mxu0 0.0
      %728 = vmatpush1.msra.mxu0 0.0
      %729 = vmatprep.subr.mxu0 0.0
      %730 = vmatpush1.msra.mxu0 0.0
      %731 = vmatprep.subr.mxu0 0.0
      %732 = vmatpush1.msra.mxu0 0.0
      %733 = vmatprep.subr.mxu0 0.0
      %734 = vmatpush1.msra.mxu0 0.0
      %735 = vmatprep.subr.mxu0 0.0
      %736 = vmatpush1.msra.mxu0 0.0
      %737 = vmatprep.subr.mxu0 0.0
      %738 = vmatpush1.msra.mxu0 0.0
      %739 = vmatprep.subr.mxu0 0.0
      %740 = vmatpush1.msra.mxu0 %v360
      %741 = vmatprep.subr.mxu0 0.0
      %742 = vmatpush1.msra.mxu0 %v359
      %743 = vmatprep.subr.mxu0 0.0
      %744 = vmatpush1.msra.mxu0 %v358
      %745 = vmatprep.subr.mxu0 0.0
      %746 = vmatpush1.msra.mxu0 %v357
      %747 = vmatprep.subr.mxu0 0.0
      %748 = vmatpush1.msra.mxu0 %v356
      %749 = vmatprep.subr.mxu0 0.0
      %750 = vmatpush1.msra.mxu0 %v355
      %751 = vmatprep.subr.mxu0 0.0
      %752 = vmatpush1.msra.mxu0 %v354
      %753 = vmatprep.subr.mxu0 0.0
      %754 = vmatpush1.msra.mxu0 %v353
      %755 = vmatprep.subr.mxu0 0.0
      %756 = vmatpush2.msra.mxu0 0.0
      %757 = vmatprep.subr.mxu0 0.0
      %758 = vmatpush2.msra.mxu0 0.0
      %759 = vmatprep.subr.mxu0 0.0
      %760 = vmatpush2.msra.mxu0 0.0
      %761 = vmatprep.subr.mxu0 0.0
      %762 = vmatpush2.msra.mxu0 0.0
      %763 = vmatprep.subr.mxu0 0.0
      %764 = vmatpush2.msra.mxu0 0.0
      %765 = vmatprep.subr.mxu0 0.0
      %766 = vmatpush2.msra.mxu0 0.0
      %767 = vmatprep.subr.mxu0 0.0
      %768 = vmatpush2.msra.mxu0 0.0
      %769 = vmatprep.subr.mxu0 0.0
      %770 = vmatpush2.msra.mxu0 0.0
      %771 = vmatprep.subr.mxu0 0.0
      %772 = vmatpush2.msra.mxu0 0.0
      %773 = vmatprep.subr.mxu0 0.0
      %774 = vmatpush2.msra.mxu0 0.0
      %775 = vmatprep.subr.mxu0 0.0
      %776 = vmatpush2.msra.mxu0 0.0
      %777 = vmatprep.subr.mxu0 0.0
      %778 = vmatpush2.msra.mxu0 0.0
      %779 = vmatprep.subr.mxu0 0.0
      %780 = vmatpush2.msra.mxu0 0.0
      %781 = vmatprep.subr.mxu0 0.0
      %782 = vmatpush2.msra.mxu0 0.0
      %783 = vmatprep.subr.mxu0 0.0
      %784 = vmatpush2.msra.mxu0 0.0
      %785 = vmatprep.subr.mxu0 0.0
      %786 = vmatpush2.msra.mxu0 0.0
      %787 = vmatprep.mubr.f32.mxu0 0.0
      %788 = vmatmul.mubr.f32.gmra.mxu0 %v718
      %v789 = vpop.f32.mrf.mxu0
      %v790 = vadd.f32 %v710, %v789
      %v791 = vpop.f32.mrf.mxu0
      %792 = vmatprep.mubr.f32.mxu0 0.0
      %793 = vmatmul.mubr.f32.gmra.mxu0 %v721
      %v794 = vpop.f32.mrf.mxu0
      %v795 = vadd.f32 %v715, %v794
      %v796 = vpop.f32.mrf.mxu0
      %797 = vdwg.mxu0
      %v798 = vmax.f32 %v790, 0.0
      %v799 = vmax.f32 %v795, 0.0
      %v800 = vld [vmem:[%s6] sm:$0xff]
      %v801 = vld [vmem:[%s6 + $0x8] sm:$0xff]
      %803 = vset.pattern.permute.xlu0 0
      %804 = vperm.xlu0 %803, %v800
      %v805 = vpop.permute.xlu0 %804
      %808 = vset.pattern.permute.xlu0 0
      %809 = vperm.xlu0 %808, %v801
      %v810 = vpop.permute.xlu0 %809
      %v812 = vmul.f32 %v798, %v805
      %v813 = vmul.f32 %v799, %v810
      %v814 = vld [vmem:[%s7] sm:$0xff]
      %v815 = vld [vmem:[%s7 + $0x8] sm:$0xff]
      %817 = vset.pattern.permute.xlu0 0
      %818 = vperm.xlu0 %817, %v814
      %v819 = vpop.permute.xlu0 %818
      %822 = vset.pattern.permute.xlu0 0
      %823 = vperm.xlu0 %822, %v815
      %v824 = vpop.permute.xlu0 %823
      %v826 = vadd.f32 %v812, %v819
      %v827 = vadd.f32 %v813, %v824
      %v828 = vtanh.pop %v826
      %v829 = vtanh.pop %v827
      %v830 = vld [vmem:[%s8] sm:$0xff]
      %v831 = vld [vmem:[%s8 + $0x8] sm:$0xff]
      %v832 = vld [vmem:[%s8 + $0x10] sm:$0xff]
      %v833 = vld [vmem:[%s8 + $0x18] sm:$0xff]
      %v834 = vld [vmem:[%s8 + $0x20] sm:$0xff]
      %v835 = vld [vmem:[%s8 + $0x28] sm:$0xff]
      %v836 = vld [vmem:[%s8 + $0x30] sm:$0xff]
      %v837 = vld [vmem:[%s8 + $0x38] sm:$0xff]
      %v839 = vsel %vm380, %v830, 0
      %v842 = vsel %vm380, %v831, 0
      %v845 = vsel %vm380, %v832, 0
      %v848 = vsel %vm380, %v833, 0
      %v851 = vsel %vm380, %v834, 0
      %v854 = vsel %vm380, %v835, 0
      %v857 = vsel %vm380, %v836, 0
      %v860 = vsel %vm380, %v837, 0
      %862 = vmatprep.subr.mxu0 0.0
      %863 = vmatpush1.msra.mxu0 0.0
      %864 = vmatprep.subr.mxu0 0.0
      %865 = vmatpush1.msra.mxu0 0.0
      %866 = vmatprep.subr.mxu0 0.0
      %867 = vmatpush1.msra.mxu0 0.0
      %868 = vmatprep.subr.mxu0 0.0
      %869 = vmatpush1.msra.mxu0 0.0
      %870 = vmatprep.subr.mxu0 0.0
      %871 = vmatpush1.msra.mxu0 0.0
      %872 = vmatprep.subr.mxu0 0.0
      %873 = vmatpush1.msra.mxu0 0.0
      %874 = vmatprep.subr.mxu0 0.0
      %875 = vmatpush1.msra.mxu0 0.0
      %876 = vmatprep.subr.mxu0 0.0
      %877 = vmatpush1.msra.mxu0 0.0
      %878 = vmatprep.subr.mxu0 0.0
      %879 = vmatpush1.msra.mxu0 0.0
      %880 = vmatprep.subr.mxu0 0.0
      %881 = vmatpush1.msra.mxu0 0.0
      %882 = vmatprep.subr.mxu0 0.0
      %883 = vmatpush1.msra.mxu0 0.0
      %884 = vmatprep.subr.mxu0 0.0
      %885 = vmatpush1.msra.mxu0 0.0
      %886 = vmatprep.subr.mxu0 0.0
      %887 = vmatpush1.msra.mxu0 0.0
      %888 = vmatprep.subr.mxu0 0.0
      %889 = vmatpush1.msra.mxu0 0.0
      %890 = vmatprep.subr.mxu0 0.0
      %891 = vmatpush1.msra.mxu0 %v829
      %892 = vmatprep.subr.mxu0 0.0
      %893 = vmatpush1.msra.mxu0 %v828
      %894 = vmatprep.subr.mxu0 0.0
      %895 = vmatpush2.msra.mxu0 0.0
      %896 = vmatprep.subr.mxu0 0.0
      %897 = vmatpush2.msra.mxu0 0.0
      %898 = vmatprep.subr.mxu0 0.0
      %899 = vmatpush2.msra.mxu0 0.0
      %900 = vmatprep.subr.mxu0 0.0
      %901 = vmatpush2.msra.mxu0 0.0
      %902 = vmatprep.subr.mxu0 0.0
      %903 = vmatpush2.msra.mxu0 0.0
      %904 = vmatprep.subr.mxu0 0.0
      %905 = vmatpush2.msra.mxu0 0.0
      %906 = vmatprep.subr.mxu0 0.0
      %907 = vmatpush2.msra.mxu0 0.0
      %908 = vmatprep.subr.mxu0 0.0
      %909 = vmatpush2.msra.mxu0 0.0
      %910 = vmatprep.subr.mxu0 0.0
      %911 = vmatpush2.msra.mxu0 0.0
      %912 = vmatprep.subr.mxu0 0.0
      %913 = vmatpush2.msra.mxu0 0.0
      %914 = vmatprep.subr.mxu0 0.0
      %915 = vmatpush2.msra.mxu0 0.0
      %916 = vmatprep.subr.mxu0 0.0
      %917 = vmatpush2.msra.mxu0 0.0
      %918 = vmatprep.subr.mxu0 0.0
      %919 = vmatpush2.msra.mxu0 0.0
      %920 = vmatprep.subr.mxu0 0.0
      %921 = vmatpush2.msra.mxu0 0.0
      %922 = vmatprep.subr.mxu0 0.0
      %923 = vmatpush2.msra.mxu0 0.0
      %924 = vmatprep.subr.mxu0 0.0
      %925 = vmatpush2.msra.mxu0 0.0
      %926 = vmatprep.mubr.f32.mxu0 0.0
      %927 = vmatmul.mubr.f32.gmra.mxu0 %v839
      %v928 = vpop.f32.mrf.mxu0
      %v929 = vadd.f32 0.0, %v928
      %v930 = vpop.f32.mrf.mxu0
      %931 = vmatprep.mubr.f32.mxu0 0.0
      %932 = vmatmul.mubr.f32.gmra.mxu0 %v842
      %v933 = vpop.f32.mrf.mxu0
      %v934 = vadd.f32 0.0, %v933
      %v935 = vpop.f32.mrf.mxu0
      %936 = vmatprep.mubr.f32.mxu0 0.0
      %937 = vmatmul.mubr.f32.gmra.mxu0 %v845
      %v938 = vpop.f32.mrf.mxu0
      %v939 = vadd.f32 0.0, %v938
      %v940 = vpop.f32.mrf.mxu0
      %941 = vmatprep.mubr.f32.mxu0 0.0
      %942 = vmatmul.mubr.f32.gmra.mxu0 %v848
      %v943 = vpop.f32.mrf.mxu0
      %v944 = vadd.f32 0.0, %v943
      %v945 = vpop.f32.mrf.mxu0
      %946 = vmatprep.mubr.f32.mxu0 0.0
      %947 = vmatmul.mubr.f32.gmra.mxu0 %v851
      %v948 = vpop.f32.mrf.mxu0
      %v949 = vadd.f32 0.0, %v948
      %v950 = vpop.f32.mrf.mxu0
      %951 = vmatprep.mubr.f32.mxu0 0.0
      %952 = vmatmul.mubr.f32.gmra.mxu0 %v854
      %v953 = vpop.f32.mrf.mxu0
      %v954 = vadd.f32 0.0, %v953
      %v955 = vpop.f32.mrf.mxu0
      %956 = vmatprep.mubr.f32.mxu0 0.0
      %957 = vmatmul.mubr.f32.gmra.mxu0 %v857
      %v958 = vpop.f32.mrf.mxu0
      %v959 = vadd.f32 0.0, %v958
      %v960 = vpop.f32.mrf.mxu0
      %961 = vmatprep.mubr.f32.mxu0 0.0
      %962 = vmatmul.mubr.f32.gmra.mxu0 %v860
      %v963 = vpop.f32.mrf.mxu0
      %v964 = vadd.f32 0.0, %v963
      %v965 = vpop.f32.mrf.mxu0
      %966 = vdwg.mxu0
      %v967 = vsel %vm371, %v929, -1e+30
      %v968 = vsel %vm371, %v934, -1e+30
      %v969 = vsel %vm371, %v939, -1e+30
      %v970 = vsel %vm371, %v944, -1e+30
      %v971 = vsel %vm371, %v949, -1e+30
      %v972 = vsel %vm371, %v954, -1e+30
      %v973 = vsel %vm371, %v959, -1e+30
      %v974 = vsel %vm371, %v964, -1e+30
      %v975 = vsel %vm380, %v967, -inf
      %976 = vmax.xlane.f32.xlu0 %v975
      %v977 = vpop.xlane.xlu0 %976
      %v978 = vsel %vm380, %v968, -inf
      %979 = vmax.xlane.f32.xlu0 %v978
      %v980 = vpop.xlane.xlu0 %979
      %v981 = vsel %vm380, %v969, -inf
      %982 = vmax.xlane.f32.xlu0 %v981
      %v983 = vpop.xlane.xlu0 %982
      %v984 = vsel %vm380, %v970, -inf
      %985 = vmax.xlane.f32.xlu0 %v984
      %v986 = vpop.xlane.xlu0 %985
      %v987 = vsel %vm380, %v971, -inf
      %988 = vmax.xlane.f32.xlu0 %v987
      %v989 = vpop.xlane.xlu0 %988
      %v990 = vsel %vm380, %v972, -inf
      %991 = vmax.xlane.f32.xlu0 %v990
      %v992 = vpop.xlane.xlu0 %991
      %v993 = vsel %vm380, %v973, -inf
      %994 = vmax.xlane.f32.xlu0 %v993
      %v995 = vpop.xlane.xlu0 %994
      %v996 = vsel %vm380, %v974, -inf
      %997 = vmax.xlane.f32.xlu0 %v996
      %v998 = vpop.xlane.xlu0 %997
      %v999 = vsub.f32 %v967, %v977
      %v1000 = vsub.f32 %v968, %v980
      %v1001 = vsub.f32 %v969, %v983
      %v1002 = vsub.f32 %v970, %v986
      %v1003 = vsub.f32 %v971, %v989
      %v1004 = vsub.f32 %v972, %v992
      %v1005 = vsub.f32 %v973, %v995
      %v1006 = vsub.f32 %v974, %v998
      %v1007 = vmul.f32 %v999, 1.442695
      %v1008 = vpow.pop %v1007
      %v1009 = vmul.f32 %v1000, 1.442695
      %v1010 = vpow.pop %v1009
      %v1011 = vmul.f32 %v1001, 1.442695
      %v1012 = vpow.pop %v1011
      %v1013 = vmul.f32 %v1002, 1.442695
      %v1014 = vpow.pop %v1013
      %v1015 = vmul.f32 %v1003, 1.442695
      %v1016 = vpow.pop %v1015
      %v1017 = vmul.f32 %v1004, 1.442695
      %v1018 = vpow.pop %v1017
      %v1019 = vmul.f32 %v1005, 1.442695
      %v1020 = vpow.pop %v1019
      %v1021 = vmul.f32 %v1006, 1.442695
      %v1022 = vpow.pop %v1021
      %v1023 = vsel %vm380, %v1008, 0.0
      %1024 = vadd.xlane.f32.xlu0 %v1023
      %v1025 = vpop.xlane.xlu0 %1024
      %v1026 = vsel %vm380, %v1010, 0.0
      %1027 = vadd.xlane.f32.xlu0 %v1026
      %v1028 = vpop.xlane.xlu0 %1027
      %v1029 = vsel %vm380, %v1012, 0.0
      %1030 = vadd.xlane.f32.xlu0 %v1029
      %v1031 = vpop.xlane.xlu0 %1030
      %v1032 = vsel %vm380, %v1014, 0.0
      %1033 = vadd.xlane.f32.xlu0 %v1032
      %v1034 = vpop.xlane.xlu0 %1033
      %v1035 = vsel %vm380, %v1016, 0.0
      %1036 = vadd.xlane.f32.xlu0 %v1035
      %v1037 = vpop.xlane.xlu0 %1036
      %v1038 = vsel %vm380, %v1018, 0.0
      %1039 = vadd.xlane.f32.xlu0 %v1038
      %v1040 = vpop.xlane.xlu0 %1039
      %v1041 = vsel %vm380, %v1020, 0.0
      %1042 = vadd.xlane.f32.xlu0 %v1041
      %v1043 = vpop.xlane.xlu0 %1042
      %v1044 = vsel %vm380, %v1022, 0.0
      %1045 = vadd.xlane.f32.xlu0 %v1044
      %v1046 = vpop.xlane.xlu0 %1045
      %v1047 = vrcp.pop %v1025
      %v1048 = vmul.f32 1.0, %v1047
      %v1049 = vrcp.pop %v1028
      %v1050 = vmul.f32 1.0, %v1049
      %v1051 = vrcp.pop %v1031
      %v1052 = vmul.f32 1.0, %v1051
      %v1053 = vrcp.pop %v1034
      %v1054 = vmul.f32 1.0, %v1053
      %v1055 = vrcp.pop %v1037
      %v1056 = vmul.f32 1.0, %v1055
      %v1057 = vrcp.pop %v1040
      %v1058 = vmul.f32 1.0, %v1057
      %v1059 = vrcp.pop %v1043
      %v1060 = vmul.f32 1.0, %v1059
      %v1061 = vrcp.pop %v1046
      %v1062 = vmul.f32 1.0, %v1061
      %v1063 = vmul.f32 %v1008, %v353
      %v1064 = vmul.f32 %v1010, %v354
      %v1065 = vmul.f32 %v1012, %v355
      %v1066 = vmul.f32 %v1014, %v356
      %v1067 = vmul.f32 %v1016, %v357
      %v1068 = vmul.f32 %v1018, %v358
      %v1069 = vmul.f32 %v1020, %v359
      %v1070 = vmul.f32 %v1022, %v360
      %v1071 = vsel %vm380, %v1063, 0.0
      %1072 = vadd.xlane.f32.xlu0 %v1071
      %v1073 = vpop.xlane.xlu0 %1072
      %v1074 = vsel %vm380, %v1064, 0.0
      %1075 = vadd.xlane.f32.xlu0 %v1074
      %v1076 = vpop.xlane.xlu0 %1075
      %v1077 = vsel %vm380, %v1065, 0.0
      %1078 = vadd.xlane.f32.xlu0 %v1077
      %v1079 = vpop.xlane.xlu0 %1078
      %v1080 = vsel %vm380, %v1066, 0.0
      %1081 = vadd.xlane.f32.xlu0 %v1080
      %v1082 = vpop.xlane.xlu0 %1081
      %v1083 = vsel %vm380, %v1067, 0.0
      %1084 = vadd.xlane.f32.xlu0 %v1083
      %v1085 = vpop.xlane.xlu0 %1084
      %v1086 = vsel %vm380, %v1068, 0.0
      %1087 = vadd.xlane.f32.xlu0 %v1086
      %v1088 = vpop.xlane.xlu0 %1087
      %v1089 = vsel %vm380, %v1069, 0.0
      %1090 = vadd.xlane.f32.xlu0 %v1089
      %v1091 = vpop.xlane.xlu0 %1090
      %v1092 = vsel %vm380, %v1070, 0.0
      %1093 = vadd.xlane.f32.xlu0 %v1092
      %v1094 = vpop.xlane.xlu0 %1093
      %v1095 = vmul.f32 %v1073, %v1048
      %v1096 = vmul.f32 %v1076, %v1050
      %v1097 = vmul.f32 %v1079, %v1052
      %v1098 = vmul.f32 %v1082, %v1054
      %v1099 = vmul.f32 %v1085, %v1056
      %v1100 = vmul.f32 %v1088, %v1058
      %v1101 = vmul.f32 %v1091, %v1060
      %v1102 = vmul.f32 %v1094, %v1062
      %v1103 = vsub.f32 %v353, %v1095
      %v1104 = vsub.f32 %v354, %v1096
      %v1105 = vsub.f32 %v355, %v1097
      %v1106 = vsub.f32 %v356, %v1098
      %v1107 = vsub.f32 %v357, %v1099
      %v1108 = vsub.f32 %v358, %v1100
      %v1109 = vsub.f32 %v359, %v1101
      %v1110 = vsub.f32 %v360, %v1102
      %v1111 = vmul.f32 %v1103, %v1103
      %v1112 = vmul.f32 %v1104, %v1104
      %v1113 = vmul.f32 %v1105, %v1105
      %v1114 = vmul.f32 %v1106, %v1106
      %v1115 = vmul.f32 %v1107, %v1107
      %v1116 = vmul.f32 %v1108, %v1108
      %v1117 = vmul.f32 %v1109, %v1109
      %v1118 = vmul.f32 %v1110, %v1110
      %v1119 = vmul.f32 %v1008, %v1111
      %v1120 = vmul.f32 %v1010, %v1112
      %v1121 = vmul.f32 %v1012, %v1113
      %v1122 = vmul.f32 %v1014, %v1114
      %v1123 = vmul.f32 %v1016, %v1115
      %v1124 = vmul.f32 %v1018, %v1116
      %v1125 = vmul.f32 %v1020, %v1117
      %v1126 = vmul.f32 %v1022, %v1118
      %v1127 = vsel %vm380, %v1119, 0.0
      %1128 = vadd.xlane.f32.xlu0 %v1127
      %v1129 = vpop.xlane.xlu0 %1128
      %v1130 = vsel %vm380, %v1120, 0.0
      %1131 = vadd.xlane.f32.xlu0 %v1130
      %v1132 = vpop.xlane.xlu0 %1131
      %v1133 = vsel %vm380, %v1121, 0.0
      %1134 = vadd.xlane.f32.xlu0 %v1133
      %v1135 = vpop.xlane.xlu0 %1134
      %v1136 = vsel %vm380, %v1122, 0.0
      %1137 = vadd.xlane.f32.xlu0 %v1136
      %v1138 = vpop.xlane.xlu0 %1137
      %v1139 = vsel %vm380, %v1123, 0.0
      %1140 = vadd.xlane.f32.xlu0 %v1139
      %v1141 = vpop.xlane.xlu0 %1140
      %v1142 = vsel %vm380, %v1124, 0.0
      %1143 = vadd.xlane.f32.xlu0 %v1142
      %v1144 = vpop.xlane.xlu0 %1143
      %v1145 = vsel %vm380, %v1125, 0.0
      %1146 = vadd.xlane.f32.xlu0 %v1145
      %v1147 = vpop.xlane.xlu0 %1146
      %v1148 = vsel %vm380, %v1126, 0.0
      %1149 = vadd.xlane.f32.xlu0 %v1148
      %v1150 = vpop.xlane.xlu0 %1149
      %v1151 = vmul.f32 %v1129, %v1048
      %v1152 = vmul.f32 %v1132, %v1050
      %v1153 = vmul.f32 %v1135, %v1052
      %v1154 = vmul.f32 %v1138, %v1054
      %v1155 = vmul.f32 %v1141, %v1056
      %v1156 = vmul.f32 %v1144, %v1058
      %v1157 = vmul.f32 %v1147, %v1060
      %v1158 = vmul.f32 %v1150, %v1062
      %v1159 = vmax.f32 %v1151, 1e-12
      %v1160 = vmax.f32 %v1152, 1e-12
      %v1161 = vmax.f32 %v1153, 1e-12
      %v1162 = vmax.f32 %v1154, 1e-12
      %v1163 = vmax.f32 %v1155, 1e-12
      %v1164 = vmax.f32 %v1156, 1e-12
      %v1165 = vmax.f32 %v1157, 1e-12
      %v1166 = vmax.f32 %v1158, 1e-12
      %v1167 = vrsqrt.pop %v1159
      %v1168 = vmul.f32 %v1159, %v1167
      %vm1169 = vcmp.eq.f32.partialorder %v1159, inf
      %v1170 = vsel %vm1169, %v1159, %v1168
      %vm1171 = vcmp.eq.f32.partialorder %v1159, 0.0
      %v1172 = vand.u32 %v1159, 2147483648
      %v1173 = vsel %vm1171, %v1172, %v1170
      %v1174 = vrsqrt.pop %v1160
      %v1175 = vmul.f32 %v1160, %v1174
      %vm1176 = vcmp.eq.f32.partialorder %v1160, inf
      %v1177 = vsel %vm1176, %v1160, %v1175
      %vm1178 = vcmp.eq.f32.partialorder %v1160, 0.0
      %v1179 = vand.u32 %v1160, 2147483648
      %v1180 = vsel %vm1178, %v1179, %v1177
      %v1181 = vrsqrt.pop %v1161
      %v1182 = vmul.f32 %v1161, %v1181
      %vm1183 = vcmp.eq.f32.partialorder %v1161, inf
      %v1184 = vsel %vm1183, %v1161, %v1182
      %vm1185 = vcmp.eq.f32.partialorder %v1161, 0.0
      %v1186 = vand.u32 %v1161, 2147483648
      %v1187 = vsel %vm1185, %v1186, %v1184
      %v1188 = vrsqrt.pop %v1162
      %v1189 = vmul.f32 %v1162, %v1188
      %vm1190 = vcmp.eq.f32.partialorder %v1162, inf
      %v1191 = vsel %vm1190, %v1162, %v1189
      %vm1192 = vcmp.eq.f32.partialorder %v1162, 0.0
      %v1193 = vand.u32 %v1162, 2147483648
      %v1194 = vsel %vm1192, %v1193, %v1191
      %v1195 = vrsqrt.pop %v1163
      %v1196 = vmul.f32 %v1163, %v1195
      %vm1197 = vcmp.eq.f32.partialorder %v1163, inf
      %v1198 = vsel %vm1197, %v1163, %v1196
      %vm1199 = vcmp.eq.f32.partialorder %v1163, 0.0
      %v1200 = vand.u32 %v1163, 2147483648
      %v1201 = vsel %vm1199, %v1200, %v1198
      %v1202 = vrsqrt.pop %v1164
      %v1203 = vmul.f32 %v1164, %v1202
      %vm1204 = vcmp.eq.f32.partialorder %v1164, inf
      %v1205 = vsel %vm1204, %v1164, %v1203
      %vm1206 = vcmp.eq.f32.partialorder %v1164, 0.0
      %v1207 = vand.u32 %v1164, 2147483648
      %v1208 = vsel %vm1206, %v1207, %v1205
      %v1209 = vrsqrt.pop %v1165
      %v1210 = vmul.f32 %v1165, %v1209
      %vm1211 = vcmp.eq.f32.partialorder %v1165, inf
      %v1212 = vsel %vm1211, %v1165, %v1210
      %vm1213 = vcmp.eq.f32.partialorder %v1165, 0.0
      %v1214 = vand.u32 %v1165, 2147483648
      %v1215 = vsel %vm1213, %v1214, %v1212
      %v1216 = vrsqrt.pop %v1166
      %v1217 = vmul.f32 %v1166, %v1216
      %vm1218 = vcmp.eq.f32.partialorder %v1166, inf
      %v1219 = vsel %vm1218, %v1166, %v1217
      %vm1220 = vcmp.eq.f32.partialorder %v1166, 0.0
      %v1221 = vand.u32 %v1166, 2147483648
      %v1222 = vsel %vm1220, %v1221, %v1219
      %vm1223 = vcmask 7168
      %1224 = vst.msk [vmem:[%s347] sm:$0xff] %vm1223, %v1095
      %1225 = vst.msk [vmem:[%s347 + $0x8] sm:$0xff] %vm1223, %v1096
      %1226 = vst.msk [vmem:[%s347 + $0x10] sm:$0xff] %vm1223, %v1097
      %1227 = vst.msk [vmem:[%s347 + $0x18] sm:$0xff] %vm1223, %v1098
      %1228 = vst.msk [vmem:[%s347 + $0x20] sm:$0xff] %vm1223, %v1099
      %1229 = vst.msk [vmem:[%s347 + $0x28] sm:$0xff] %vm1223, %v1100
      %1230 = vst.msk [vmem:[%s347 + $0x30] sm:$0xff] %vm1223, %v1101
      %1231 = vst.msk [vmem:[%s347 + $0x38] sm:$0xff] %vm1223, %v1102
      %1232 = vst.msk [vmem:[%s352] sm:$0xff] %vm1223, %v1173
      %1233 = vst.msk [vmem:[%s352 + $0x8] sm:$0xff] %vm1223, %v1180
      %1234 = vst.msk [vmem:[%s352 + $0x10] sm:$0xff] %vm1223, %v1187
      %1235 = vst.msk [vmem:[%s352 + $0x18] sm:$0xff] %vm1223, %v1194
      %1236 = vst.msk [vmem:[%s352 + $0x20] sm:$0xff] %vm1223, %v1201
      %1237 = vst.msk [vmem:[%s352 + $0x28] sm:$0xff] %vm1223, %v1208
      %1238 = vst.msk [vmem:[%s352 + $0x30] sm:$0xff] %vm1223, %v1215
      %1239 = vst.msk [vmem:[%s352 + $0x38] sm:$0xff] %vm1223, %v1222
      %p1240 = scmp.lt.s32.totalorder %s28, 1
      %s1241 = scalar_select %p1240, %s28, 1
      %s1242 = smul.addr %s1241, 8
      %s1243 = smul.addr %s1242, 8
      %s1244 = scalar_lea.vmem %s9, %s1243
      %p1245 = scmp.lt.s32.totalorder %s28, 1
      %s1246 = scalar_select %p1245, %s28, 1
      %s1247 = smul.addr %s1246, 8
      %s1248 = smul.addr %s1247, 8
      %s1249 = scalar_lea.vmem %s10, %s1248
      // Predicated region
      $region53: #{tpu_custom_call.1} parent=51 // pred_check
        %p1250 = pneg %p219
      $region54: #{tpu_custom_call.1} parent=51 // pred_check_branch
        %1252 = sbr.rel (%p1250) target = $region56
      $region55: #{tpu_custom_call.1} parent=51 // pred_region
        _
      $region56: #{tpu_custom_call.1} parent=51 // pred_fallthru
        _
      // Predicated region
      $region57: #{tpu_custom_call.1} parent=51 // pred_check
        %p1253 = pneg %p245
      $region58: #{tpu_custom_call.1} parent=51 // pred_check_branch
        %1255 = sbr.rel (%p1253) target = $region60
      $region59: #{tpu_custom_call.1} parent=51 // pred_region
        _
      $region60: #{tpu_custom_call.1} parent=51 // pred_fallthru
        _
    $region52: #{tpu_custom_call.1} parent=5 // pred_fallthru
      _
    %p1256 = scmp.le.s32.totalorder 2, %s23
    // Predicated region
    $region61: #{tpu_custom_call.1} parent=5 // pred_check
      %p1257 = pneg %p1256
    $region62: #{tpu_custom_call.1} parent=5 // pred_check_branch
      %1259 = sbr.rel (%p1257) target = $region64
    $region63: #{tpu_custom_call.1} parent=5 // pred_region
      %s1260 = ssub.s32 %s23, 2
      // Predicated region
      $region65: #{tpu_custom_call.1} parent=63 // pred_check
        %p1261 = pneg %p225
      $region66: #{tpu_custom_call.1} parent=63 // pred_check_branch
        %1263 = sbr.rel (%p1261) target = $region68
      $region67: #{tpu_custom_call.1} parent=63 // pred_region
        %p1264 = scmp.lt.s32.totalorder %s29, 1
        %s1265 = scalar_select %p1264, %s29, 1
        %s1266 = smul.addr %s1265, 8
        %s1267 = smul.addr %s1266, 8
        %s1268 = scalar_lea.vmem %s9, %s1267
      $region68: #{tpu_custom_call.1} parent=63 // pred_fallthru
        _
      // Predicated region
      $region69: #{tpu_custom_call.1} parent=63 // pred_check
        %p1269 = pneg %p251
      $region70: #{tpu_custom_call.1} parent=63 // pred_check_branch
        %1271 = sbr.rel (%p1269) target = $region72
      $region71: #{tpu_custom_call.1} parent=63 // pred_region
        %p1272 = scmp.lt.s32.totalorder %s29, 1
        %s1273 = scalar_select %p1272, %s29, 1
        %s1274 = smul.addr %s1273, 8
        %s1275 = smul.addr %s1274, 8
        %s1276 = scalar_lea.vmem %s10, %s1275
      $region72: #{tpu_custom_call.1} parent=63 // pred_fallthru
        _
    $region64: #{tpu_custom_call.1} parent=5 // pred_fallthru
      _
  $region6: #{tpu_custom_call.1} parent=0 // loop_footer
    %s27 = sadd.s32 1, %s23
  $region7: #{tpu_custom_call.1} parent=0 // loop_footer_branch
    %22 = sbr.rel target = $region3
  $region8: #{tpu_custom_call.1} parent=0 // loop_exit
    _

</llo_original>
